<compile_context>
chip_gen: v5e
topology: v5e:2x2
jax: 0.10.0
libtpu: 0.0.40
codegen_flags: <defaults>
</compile_context>

<pallas_src>
import functools
import math

import jax
import jax.numpy as jnp
from jax import lax
from jax.experimental import pallas as pl
from jax.experimental.pallas import tpu as pltpu


def _round_up(x, m):
    return ((x + m - 1) // m) * m


def _mlm_head_kernel(x_ref, w1_ref, b1_ref, gamma_ref, beta_ref,
                     wd_ref, dbias_ref, out_ref, ln_ref, *, row_chunk):
    # x_ref:     (tm, H)  bf16  current block of token rows
    # w1_ref:    (H, H)   bf16  transform dense weight, stored (in, out)
    # b1_ref:    (1, H)   f32
    # gamma_ref: (1, H)   f32   LayerNorm weight
    # beta_ref:  (1, H)   f32   LayerNorm bias
    # wd_ref:    (H, tv)  bf16  decoder weight tile, stored (in, out)
    # dbias_ref: (1, tv)  f32   decoder bias tile
    # out_ref:   (tm, tv) out_dtype
    # ln_ref:    (tm, H)  bf16  VMEM scratch: cached LayerNorm output

    # Transform is recomputed only when the row tile changes (j == 0); all
    # vocab tiles of this row tile read the cached result from scratch.
    # It is done in row_chunk-row sub-blocks (static slices) so the f32
    # temporaries stay small even for tm=1024.
    @pl.when(pl.program_id(1) == 0)
    def _():
        n_chunks = ln_ref.shape[0] // row_chunk
        for c in range(n_chunks):                     # static unroll
            r0 = c * row_chunk
            x = x_ref[pl.ds(r0, row_chunk), :]        # bf16
            h = jnp.dot(x, w1_ref[...], preferred_element_type=jnp.float32)
            h = h + b1_ref[...]
            # exact (erf-based) GELU: nn.GELU() default
            h = 0.5 * h * (1.0 + lax.erf(h * (1.0 / math.sqrt(2.0))))
            # LayerNorm over last dim, eps=1e-12, biased variance, f32 stats
            mean = jnp.mean(h, axis=-1, keepdims=True)
            cen = h - mean
            var = jnp.mean(cen * cen, axis=-1, keepdims=True)
            inv = lax.rsqrt(var + 1e-12)
            ln = cen * inv * gamma_ref[...] + beta_ref[...]
            ln_ref[pl.ds(r0, row_chunk), :] = ln.astype(jnp.bfloat16)

    # Decoder: (tm,H)@(H,tv) on the MXU, bf16 operands, f32 accumulate.
    out_ref[...] = (jnp.dot(ln_ref[...], wd_ref[...],
                            preferred_element_type=jnp.float32)
                    + dbias_ref[...]).astype(out_ref.dtype)


def bert_only_mlm_head(sequence_output, params, *, tm=1024, tv=1024,
                       out_dtype=jnp.float32,
                       vmem_limit_bytes=48 * 1024 * 1024):
    """sequence_output: (B, S, H) -> (B, S, V) logits (out_dtype)."""
    B, S, H = sequence_output.shape
    V = params["vocab_size"]
    wd = params["decoder_w"]          # (H, V_store) bf16, pre-padded at init
    db = params["decoder_b"]          # (1, V_store) f32
    V_store = wd.shape[1]
    M = B * S

    # ---- Row tiling: sublane-aligned.  If one tile would cover all rows,
    # halve it so the "parallel" axis has >=2 tiles (keeps both v7x TCs busy).
    tm = max(8, min(tm, _round_up(M, 8)))
    M_pad = _round_up(M, tm)
    if M_pad // tm < 2 and _round_up(M, 8) >= 16:
        tm = _round_up(pl.cdiv(_round_up(M, 8), 2), 8)
        M_pad = _round_up(M, tm)

    # ---- Vocab tiling: lane-aligned.  Weights are already padded at init to
    # the tile quantum, so this per-call pad is normally a no-op.
    tv = max(128, min(tv, _round_up(V_store, 128)))
    V_pad = _round_up(V_store, tv)
    if V_pad != V_store:
        wd = jnp.pad(wd, ((0, 0), (0, V_pad - V_store)))
        db = jnp.pad(db, ((0, 0), (0, V_pad - V_store)))

    # x cast to bf16 on the host (first matmul is bf16 anyway): halves x DMA
    # and its double-buffered VMEM footprint, removes the in-kernel cast.
    x = sequence_output.reshape(M, H).astype(jnp.bfloat16)
    if M_pad != M:
        x = jnp.pad(x, ((0, M_pad - M), (0, 0)))

    # Transform sub-chunk size: caps f32 temporaries at ~row_chunk x H.
    row_chunk = 256 if tm % 256 == 0 else tm

    grid = (M_pad // tm, V_pad // tv)
    kernel = functools.partial(_mlm_head_kernel, row_chunk=row_chunk)

    out = pl.pallas_call(
        kernel,
        out_shape=jax.ShapeDtypeStruct((M_pad, V_pad), out_dtype),
        grid_spec=pltpu.PrefetchScalarGridSpec(
            num_scalar_prefetch=0,
            grid=grid,
            in_specs=[
                pl.BlockSpec((tm, H), lambda i, j: (i, 0)),   # x rows (bf16)
                pl.BlockSpec((H, H), lambda i, j: (0, 0)),    # transform W (bf16)
                pl.BlockSpec((1, H), lambda i, j: (0, 0)),    # transform b
                pl.BlockSpec((1, H), lambda i, j: (0, 0)),    # LN gamma
                pl.BlockSpec((1, H), lambda i, j: (0, 0)),    # LN beta
                pl.BlockSpec((H, tv), lambda i, j: (0, j)),   # decoder W tile (bf16)
                pl.BlockSpec((1, tv), lambda i, j: (0, j)),   # decoder bias tile
            ],
            out_specs=pl.BlockSpec((tm, tv), lambda i, j: (i, j)),
            scratch_shapes=[pltpu.VMEM((tm, H), jnp.bfloat16)],
        ),
        compiler_params=pltpu.CompilerParams(
            dimension_semantics=("parallel", "arbitrary"),
            vmem_limit_bytes=vmem_limit_bytes),
    )(x,
      params["transform_w"], params["transform_b"],
      params["ln_gamma"], params["ln_beta"],
      wd, db)

    # Row padding is always trimmed; vocab padding is trimmed to preserve the
    # module's (B, S, V) output contract.
    # TODO(synk): if downstream can mask columns >= V (padded columns are
    # exactly 0), return the padded logits instead to avoid this M x V copy.
    return out[:M, :V].reshape(B, S, V)


def init_params(key, hidden_size, vocab_size, *, pad_vocab_to=1024):
    """Weights stored as (in, out) == W^T of the PyTorch (out, in) layout.

    The decoder weight/bias are zero-padded to a multiple of `pad_vocab_to`
    once here, so the per-call wrapper does no HBM->HBM weight copies.
    """
    k1, k2, k3 = jax.random.split(key, 3)
    bound = 1.0 / math.sqrt(hidden_size)
    transform_w = jax.random.uniform(k1, (hidden_size, hidden_size),
                                     jnp.float32, -bound, bound)
    transform_b = jax.random.uniform(k2, (1, hidden_size),
                                     jnp.float32, -bound, bound)
    decoder_w = jax.random.uniform(k3, (hidden_size, vocab_size),
                                   jnp.float32, -bound, bound)
    v_store = _round_up(vocab_size, pad_vocab_to)
    decoder_w = jnp.pad(decoder_w, ((0, 0), (0, v_store - vocab_size)))
    # self.bias = zeros(vocab_size), aliased onto decoder.bias
    decoder_b = jnp.zeros((1, v_store), jnp.float32)
    return {
        "transform_w": transform_w.astype(jnp.bfloat16),
        "transform_b": transform_b,
        "ln_gamma": jnp.ones((1, hidden_size), jnp.float32),
        "ln_beta": jnp.zeros((1, hidden_size), jnp.float32),
        "decoder_w": decoder_w.astype(jnp.bfloat16),
        "decoder_b": decoder_b,
        "vocab_size": vocab_size,
    }


def _reference(x, params):
    """Pure-JAX reference with identical bf16 matmul / f32 stat precision."""
    B, S, H = x.shape
    V = params["vocab_size"]
    xm = x.reshape(B * S, H)
    h = jnp.dot(xm.astype(jnp.bfloat16), params["transform_w"],
                preferred_element_type=jnp.float32) + params["transform_b"]
    h = 0.5 * h * (1.0 + lax.erf(h / math.sqrt(2.0)))
    mean = jnp.mean(h, axis=-1, keepdims=True)
    var = jnp.mean((h - mean) ** 2, axis=-1, keepdims=True)
    ln = (h - mean) * lax.rsqrt(var + 1e-12)
    ln = ln * params["ln_gamma"] + params["ln_beta"]
    out = jnp.dot(ln.astype(jnp.bfloat16), params["decoder_w"][:, :V],
                  preferred_element_type=jnp.float32) + params["decoder_b"][:, :V]
    return out.reshape(B, S, V)


if __name__ == "__main__":
    # Small shapes consistent with the module; V deliberately not a multiple
    # of the tile size to exercise the padding path, M small enough to also
    # exercise the ">=2 row tiles" split.
    B, S, H, V = 2, 8, 256, 600
    key = jax.random.PRNGKey(0)
    kx, kp = jax.random.split(key)
    x = jax.random.normal(kx, (B, S, H), jnp.float32)
    params = init_params(kp, H, V)

    out = bert_only_mlm_head(x, params)
    out = jax.block_until_ready(out)

    ref = _reference(x, params)
    assert out.shape == (B, S, V)
    assert jnp.allclose(out, ref, atol=1e-2, rtol=1e-2), "mismatch vs reference"
    print("KERNEL_OK")
</pallas_src>

<mosaic_0001>
module attributes {stable_mosaic.version = 11 : i64} {
  func.func @_mlm_head_kernel(%arg0: i32, %arg1: i32, %arg2: memref<8x256xbf16, #tpu.memory_space<vmem>>, %arg3: memref<256x256xbf16, #tpu.memory_space<vmem>>, %arg4: memref<1x256xf32, #tpu.memory_space<vmem>>, %arg5: memref<1x256xf32, #tpu.memory_space<vmem>>, %arg6: memref<1x256xf32, #tpu.memory_space<vmem>>, %arg7: memref<256x1024xbf16, #tpu.memory_space<vmem>>, %arg8: memref<1x1024xf32, #tpu.memory_space<vmem>>, %arg9: memref<8x1024xf32, #tpu.memory_space<vmem>>, %arg10: memref<8x256xbf16, #tpu.memory_space<vmem>>) attributes {dimension_semantics = [#tpu.dimension_semantics<parallel>, #tpu.dimension_semantics<arbitrary>], iteration_bounds = array<i64: 2, 1>, scalar_prefetch = 0 : i64, scratch_operands = 1 : i64, tpu.core_type = #tpu.core_type<tc>, window_params = [{transform_indices = @transform_0, window_bounds = array<i64: 8, 256>}, {pipeline_mode = #tpu.pipeline_mode<synchronous>, transform_indices = @transform_1, window_bounds = array<i64: 256, 256>}, {pipeline_mode = #tpu.pipeline_mode<synchronous>, transform_indices = @transform_2, window_bounds = array<i64: 1, 256>}, {pipeline_mode = #tpu.pipeline_mode<synchronous>, transform_indices = @transform_3, window_bounds = array<i64: 1, 256>}, {pipeline_mode = #tpu.pipeline_mode<synchronous>, transform_indices = @transform_4, window_bounds = array<i64: 1, 256>}, {transform_indices = @transform_5, window_bounds = array<i64: 256, 1024>}, {transform_indices = @transform_6, window_bounds = array<i64: 1, 1024>}, {transform_indices = @transform_7, window_bounds = array<i64: 8, 1024>}]} {
    %c0_i32 = arith.constant 0 : i32
    %0 = arith.cmpi eq, %arg1, %c0_i32 : i32
    %1 = arith.extui %0 : i1 to i32
    %c0_i32_0 = arith.constant 0 : i32
    %2 = arith.cmpi ne, %1, %c0_i32_0 : i32
    scf.if %2 {
      %c0_8 = arith.constant 0 : index
      %c0_9 = arith.constant 0 : index
      %10 = vector.load %arg2[%c0_8, %c0_9] : memref<8x256xbf16, #tpu.memory_space<vmem>>, vector<8x256xbf16>
      %c0_10 = arith.constant 0 : index
      %c0_11 = arith.constant 0 : index
      %11 = vector.load %arg3[%c0_10, %c0_11] : memref<256x256xbf16, #tpu.memory_space<vmem>>, vector<256x256xbf16>
      %cst_12 = arith.constant dense<0.000000e+00> : vector<8x256xf32>
      %12 = tpu.matmul %10, %11, %cst_12 {dimension_numbers = #tpu.dot_dimension_numbers<[1], [0], [0], [1], [0, 0, 1, 1], [], []>} : vector<8x256xbf16>, vector<256x256xbf16>, vector<8x256xf32> -> vector<8x256xf32>
      %c0_13 = arith.constant 0 : index
      %c0_14 = arith.constant 0 : index
      %13 = vector.load %arg4[%c0_13, %c0_14] : memref<1x256xf32, #tpu.memory_space<vmem>>, vector<1x256xf32>
      %14 = vector.broadcast %13 : vector<1x256xf32> to vector<8x256xf32>
      %15 = arith.addf %12, %14 : vector<8x256xf32>
      %cst_15 = arith.constant 5.000000e-01 : f32
      %16 = vector.broadcast %cst_15 : f32 to vector<8x256xf32>
      %17 = arith.mulf %16, %15 : vector<8x256xf32>
      %cst_16 = arith.constant 0.707106769 : f32
      %18 = vector.broadcast %cst_16 : f32 to vector<8x256xf32>
      %19 = arith.mulf %15, %18 : vector<8x256xf32>
      %20 = math.erf %19 : vector<8x256xf32>
      %cst_17 = arith.constant 1.000000e+00 : f32
      %21 = vector.broadcast %cst_17 : f32 to vector<8x256xf32>
      %22 = arith.addf %21, %20 : vector<8x256xf32>
      %23 = arith.mulf %17, %22 : vector<8x256xf32>
      %cst_18 = arith.constant dense<0.000000e+00> : vector<8xf32>
      %24 = vector.multi_reduction <add>, %23, %cst_18 [1] : vector<8x256xf32> to vector<8xf32>
      %25 = vector.shape_cast %24 : vector<8xf32> to vector<8x1xf32>
      %cst_19 = arith.constant 2.560000e+02 : f32
      %26 = vector.broadcast %cst_19 : f32 to vector<8x1xf32>
      %27 = arith.divf %25, %26 : vector<8x1xf32>
      %28 = vector.broadcast %27 : vector<8x1xf32> to vector<8x256xf32>
      %29 = arith.subf %23, %28 : vector<8x256xf32>
      %30 = arith.mulf %29, %29 : vector<8x256xf32>
      %cst_20 = arith.constant dense<0.000000e+00> : vector<8xf32>
      %31 = vector.multi_reduction <add>, %30, %cst_20 [1] : vector<8x256xf32> to vector<8xf32>
      %32 = vector.shape_cast %31 : vector<8xf32> to vector<8x1xf32>
      %cst_21 = arith.constant 2.560000e+02 : f32
      %33 = vector.broadcast %cst_21 : f32 to vector<8x1xf32>
      %34 = arith.divf %32, %33 : vector<8x1xf32>
      %cst_22 = arith.constant 9.99999996E-13 : f32
      %35 = vector.broadcast %cst_22 : f32 to vector<8x1xf32>
      %36 = arith.addf %34, %35 : vector<8x1xf32>
      %37 = math.rsqrt %36 : vector<8x1xf32>
      %38 = vector.broadcast %37 : vector<8x1xf32> to vector<8x256xf32>
      %39 = arith.mulf %29, %38 : vector<8x256xf32>
      %c0_23 = arith.constant 0 : index
      %c0_24 = arith.constant 0 : index
      %40 = vector.load %arg5[%c0_23, %c0_24] : memref<1x256xf32, #tpu.memory_space<vmem>>, vector<1x256xf32>
      %41 = vector.broadcast %40 : vector<1x256xf32> to vector<8x256xf32>
      %42 = arith.mulf %39, %41 : vector<8x256xf32>
      %c0_25 = arith.constant 0 : index
      %c0_26 = arith.constant 0 : index
      %43 = vector.load %arg6[%c0_25, %c0_26] : memref<1x256xf32, #tpu.memory_space<vmem>>, vector<1x256xf32>
      %44 = vector.broadcast %43 : vector<1x256xf32> to vector<8x256xf32>
      %45 = arith.addf %42, %44 : vector<8x256xf32>
      %46 = arith.truncf %45 : vector<8x256xf32> to vector<8x256xbf16>
      %c0_27 = arith.constant 0 : index
      %c0_28 = arith.constant 0 : index
      %47 = vector.load %arg10[%c0_27, %c0_28] : memref<8x256xbf16, #tpu.memory_space<vmem>>, vector<8x256xbf16>
      tpu.vector_store %arg10[%c0_27, %c0_28], %46 {strides = array<i32>} : memref<8x256xbf16, #tpu.memory_space<vmem>>, vector<8x256xbf16>,
    } else {
    }
    %c0 = arith.constant 0 : index
    %c0_1 = arith.constant 0 : index
    %3 = vector.load %arg10[%c0, %c0_1] : memref<8x256xbf16, #tpu.memory_space<vmem>>, vector<8x256xbf16>
    %c0_2 = arith.constant 0 : index
    %c0_3 = arith.constant 0 : index
    %4 = vector.load %arg7[%c0_2, %c0_3] : memref<256x1024xbf16, #tpu.memory_space<vmem>>, vector<256x1024xbf16>
    %cst = arith.constant dense<0.000000e+00> : vector<8x1024xf32>
    %5 = tpu.matmul %3, %4, %cst {dimension_numbers = #tpu.dot_dimension_numbers<[1], [0], [0], [1], [0, 0, 1, 1], [], []>} : vector<8x256xbf16>, vector<256x1024xbf16>, vector<8x1024xf32> -> vector<8x1024xf32>
    %c0_4 = arith.constant 0 : index
    %c0_5 = arith.constant 0 : index
    %6 = vector.load %arg8[%c0_4, %c0_5] : memref<1x1024xf32, #tpu.memory_space<vmem>>, vector<1x1024xf32>
    %7 = vector.broadcast %6 : vector<1x1024xf32> to vector<8x1024xf32>
    %8 = arith.addf %5, %7 : vector<8x1024xf32>
    %c0_6 = arith.constant 0 : index
    %c0_7 = arith.constant 0 : index
    %9 = vector.load %arg9[%c0_6, %c0_7] : memref<8x1024xf32, #tpu.memory_space<vmem>>, vector<8x1024xf32>
    tpu.vector_store %arg9[%c0_6, %c0_7], %8 {strides = array<i32>} : memref<8x1024xf32, #tpu.memory_space<vmem>>, vector<8x1024xf32>,
    return
  }
  func.func @transform_0(%arg0: i32, %arg1: i32) -> (i32, i32) {
    %c0_i32 = arith.constant 0 : i32
    %c0_i32_0 = arith.constant 0 : i32
    return %arg0, %c0_i32 : i32, i32
  }
  func.func @transform_1(%arg0: i32, %arg1: i32) -> (i32, i32) {
    %c0_i32 = arith.constant 0 : i32
    %c0_i32_0 = arith.constant 0 : i32
    %c0_i32_1 = arith.constant 0 : i32
    return %c0_i32, %c0_i32_0 : i32, i32
  }
  func.func @transform_2(%arg0: i32, %arg1: i32) -> (i32, i32) {
    %c0_i32 = arith.constant 0 : i32
    %c0_i32_0 = arith.constant 0 : i32
    %c0_i32_1 = arith.constant 0 : i32
    return %c0_i32, %c0_i32_0 : i32, i32
  }
  func.func @transform_3(%arg0: i32, %arg1: i32) -> (i32, i32) {
    %c0_i32 = arith.constant 0 : i32
    %c0_i32_0 = arith.constant 0 : i32
    %c0_i32_1 = arith.constant 0 : i32
    return %c0_i32, %c0_i32_0 : i32, i32
  }
  func.func @transform_4(%arg0: i32, %arg1: i32) -> (i32, i32) {
    %c0_i32 = arith.constant 0 : i32
    %c0_i32_0 = arith.constant 0 : i32
    %c0_i32_1 = arith.constant 0 : i32
    return %c0_i32, %c0_i32_0 : i32, i32
  }
  func.func @transform_5(%arg0: i32, %arg1: i32) -> (i32, i32) {
    %c0_i32 = arith.constant 0 : i32
    %c0_i32_0 = arith.constant 0 : i32
    return %c0_i32, %arg1 : i32, i32
  }
  func.func @transform_6(%arg0: i32, %arg1: i32) -> (i32, i32) {
    %c0_i32 = arith.constant 0 : i32
    %c0_i32_0 = arith.constant 0 : i32
    return %c0_i32, %arg1 : i32, i32
  }
  func.func @transform_7(%arg0: i32, %arg1: i32) -> (i32, i32) {
    %c0_i32 = arith.constant 0 : i32
    return %arg0, %arg1 : i32, i32
  }
}

</mosaic_0001>

<llo_original>
// kernel: tpu_custom_call.1
$region0: #{tpu_custom_call.1}
  #allocation0 [shape = 'u32[]', space=smem, size = 0x4, offset = 0x4, fixed_abs, tag = 'smem constant byte address 0x4 - core index']
  #allocation1 [shape = 'u32[72,128]{1,0:T(1,128)}', space=vmem, size = 0x9000, scoped, tag = 'internal scratch']
  #allocation2 [shape = 'bf16[8,256]{1,0:T(8,128)(2,1)}', space=vmem, size = 0x1000, scoped, tag = 'scratch operand']
  %s0 = inlined_call_operand.hbm [shape: bf16[16,256], index: 0, kind: input, shape index: {}]
  %s1 = inlined_call_operand.hbm [shape: bf16[256,256], index: 1, kind: input, shape index: {}]
  %s2 = inlined_call_operand.hbm [shape: f32[1,256], index: 2, kind: input, shape index: {}]
  %s3 = inlined_call_operand.vmem [shape: f32[1,256], index: 3, kind: input, shape index: {}]
  %s4 = inlined_call_operand.hbm [shape: f32[1,256], index: 4, kind: input, shape index: {}]
  %s5 = inlined_call_operand.hbm [shape: bf16[256,1024], index: 5, kind: input, shape index: {}]
  %s6 = inlined_call_operand.hbm [shape: f32[1,1024], index: 6, kind: input, shape index: {}]
  %s7 = inlined_call_operand.hbm [shape: f32[16,1024], index: 7, kind: output, shape index: {}]
  %s8 = sld [smem:[#allocation0]]
  $region89: #{tpu_custom_call.1} parent=0
    _
  %s10 = ssub.s32 1, %s8
  %s11 = scalar_select 0, %s10, %s8
  $region1: #{tpu_custom_call.1} parent=0
    #allocation3 [shape = 'u8[8192]{0}', space=vmem, size = 0x2000, scoped, tag = 'input window, operand 0']
    #allocation4 [shape = 's32[2]{0}', space=sflag, size = 0x8, scoped, tag = 'scoped memory for tpu_custom_call.1']
    #allocation5 [shape = 's32[2]{0}', space=sflag, size = 0x8, scoped, tag = 'scoped memory for tpu_custom_call.1']
    #allocation6 [shape = 'u8[131072]{0}', space=vmem, size = 0x20000, scoped, tag = 'input window, operand 1, single buffered']
    #allocation7 [shape = 's32[1]{0}', space=sflag, size = 0x4, scoped, tag = 'scoped memory for tpu_custom_call.1']
    #allocation8 [shape = 'u8[1024]{0}', space=vmem, size = 0x400, scoped, tag = 'input window, operand 2, single buffered']
    #allocation9 [shape = 'u8[1024]{0}', space=vmem, size = 0x400, scoped, tag = 'input window, operand 4, single buffered']
    #allocation10 [shape = 's32[1]{0}', space=sflag, size = 0x4, scoped, tag = 'scoped memory for tpu_custom_call.1']
    #allocation11 [shape = 'u8[524288]{0}', space=vmem, size = 0x80000, scoped, tag = 'input window, operand 5, single buffered']
    #allocation12 [shape = 'u8[4096]{0}', space=vmem, size = 0x1000, scoped, tag = 'input window, operand 6, single buffered']
    #allocation13 [shape = 's32[1]{0}', space=sflag, size = 0x4, scoped, tag = 'scoped memory for tpu_custom_call.1']
    #allocation14 [shape = 'u8[65536]{0}', space=vmem, size = 0x10000, scoped, tag = 'output window, operand 0']
    %12 = vsyncpa [#allocation4], 0
    %s13 = scalar_lea.sflag [#allocation4], 1
    %14 = vsyncpa %s13, 0
    %15 = vsyncpa [#allocation7], 0
    %16 = vsyncpa [#allocation10], 0
    %17 = vsyncpa [#allocation13], 0
    %18 = vsyncpa [#allocation5], 0
    %s19 = scalar_lea.sflag [#allocation5], 1
    %20 = vsyncpa %s19, 0
    loop: start=0, step=1, limit=4
    $region2: #{tpu_custom_call.1} parent=1 // loop_pre_header
      _
    $region3: #{tpu_custom_call.1} parent=1 // loop_header
      %s22 = sphi 0, %s26
      %p23 = scmp.ge.s32.totalorder %s22, 4
      %s29 = sphi 0, %s41
      %s30 = sphi 0, %s37
      %s31 = sphi 0, %s29
      %s32 = sphi 0, %s30
      %s33 = sphi 0, %s31
      %s34 = sphi 0, %s32
      %s44 = sphi 0, %s46
      %s47 = sphi 0, %s44
      %s48 = sphi 0, %s47
      %s64 = sphi 0, %s48
      %s68 = sphi 0, %s68
      %s70 = sphi 0, %s68
      %s71 = sphi 0, %s70
      %s85 = sphi 0, %s71
      %s89 = sphi 0, %s89
      %s91 = sphi 0, %s89
      %s92 = sphi 0, %s91
      %s106 = sphi 0, %s92
      %s110 = sphi 0, %s110
      %s112 = sphi 0, %s110
      %s113 = sphi 0, %s112
      %s127 = sphi 0, %s113
      %s131 = sphi 0, %s131
      %s133 = sphi 0, %s131
      %s134 = sphi 0, %s133
      %s148 = sphi 0, %s134
      %s154 = sphi 0, %s156
      %s157 = sphi 0, %s154
      %s158 = sphi 0, %s157
      %s174 = sphi 0, %s158
      %s180 = sphi 0, %s182
      %s183 = sphi 0, %s180
      %s184 = sphi 0, %s183
      %s200 = sphi 0, %s184
      %s208 = sphi 0, %s210
      %s211 = sphi 0, %s208
      %s212 = sphi 0, %s211
      %s228 = sphi 0, %s212
    $region4: #{tpu_custom_call.1} parent=1 // loop_header_branch
      %25 = sbr.rel (%p23) target = $region8
    $region5: #{tpu_custom_call.1} parent=1 // loop_body
      %s27 = ssub.s32 %s22, 1
      %s28 = ssub.s32 %s22, 2
      %s35 = sadd.s32 1, %s30
      %p36 = scmp.ge.s32.totalorder %s35, 1
      %s37 = scalar_select %p36, 0, %s35
      %s38 = sadd.s32 1, %s29
      %s39 = scalar_select %p36, %s38, %s29
      %p40 = scmp.ge.s32.totalorder %s39, 2
      %s41 = scalar_select %p40, 0, %s39
      %s42 = ssub.s32 %s29, %s41
      %p43 = scmp.eq.s32.totalorder %s42, 0
      %s45 = sadd.s32 %s44, 1
      %s46 = scalar_select %p43, %s44, %s45
      %p49 = pneg %p43
      %p50 = scmp.eq.s32.totalorder %s22, 1
      %p51 = por %p49, %p50
      %p52 = scmp.ne.s32.totalorder %s44, %s47
      %p53 = scmp.eq.s32.totalorder %s22, 0
      %p54 = por %p52, %p53
      %p55 = scmp.ne.s32.totalorder %s44, %s47
      %p56 = scmp.eq.s32.totalorder %s27, 1
      %p57 = por %p55, %p56
      %p58 = scmp.ne.s32.totalorder %s47, %s48
      %p59 = scmp.eq.s32.totalorder %s27, 0
      %p60 = por %p58, %p59
      %p61 = scmp.ne.s32.totalorder %s47, %s48
      %p62 = scmp.eq.s32.totalorder %s28, 1
      %p63 = por %p61, %p62
      %p65 = scmp.ne.s32.totalorder %s48, %s64
      %p66 = scmp.eq.s32.totalorder %s28, 0
      %p67 = por %p65, %p66
      %s69 = sadd.s32 %s68, 1
      %p72 = scmp.eq.s32.totalorder %s22, 1
      %p73 = scmp.ne.s32.totalorder %s68, %s70
      %p74 = scmp.eq.s32.totalorder %s22, 0
      %p75 = por %p73, %p74
      %p76 = scmp.ne.s32.totalorder %s68, %s70
      %p77 = scmp.eq.s32.totalorder %s27, 1
      %p78 = por %p76, %p77
      %p79 = scmp.ne.s32.totalorder %s70, %s71
      %p80 = scmp.eq.s32.totalorder %s27, 0
      %p81 = por %p79, %p80
      %p82 = scmp.ne.s32.totalorder %s70, %s71
      %p83 = scmp.eq.s32.totalorder %s28, 1
      %p84 = por %p82, %p83
      %p86 = scmp.ne.s32.totalorder %s71, %s85
      %p87 = scmp.eq.s32.totalorder %s28, 0
      %p88 = por %p86, %p87
      %s90 = sadd.s32 %s89, 1
      %p93 = scmp.eq.s32.totalorder %s22, 1
      %p94 = scmp.ne.s32.totalorder %s89, %s91
      %p95 = scmp.eq.s32.totalorder %s22, 0
      %p96 = por %p94, %p95
      %p97 = scmp.ne.s32.totalorder %s89, %s91
      %p98 = scmp.eq.s32.totalorder %s27, 1
      %p99 = por %p97, %p98
      %p100 = scmp.ne.s32.totalorder %s91, %s92
      %p101 = scmp.eq.s32.totalorder %s27, 0
      %p102 = por %p100, %p101
      %p103 = scmp.ne.s32.totalorder %s91, %s92
      %p104 = scmp.eq.s32.totalorder %s28, 1
      %p105 = por %p103, %p104
      %p107 = scmp.ne.s32.totalorder %s92, %s106
      %p108 = scmp.eq.s32.totalorder %s28, 0
      %p109 = por %p107, %p108
      %s111 = sadd.s32 %s110, 1
      %p114 = scmp.eq.s32.totalorder %s22, 1
      %p115 = scmp.ne.s32.totalorder %s110, %s112
      %p116 = scmp.eq.s32.totalorder %s22, 0
      %p117 = por %p115, %p116
      %p118 = scmp.ne.s32.totalorder %s110, %s112
      %p119 = scmp.eq.s32.totalorder %s27, 1
      %p120 = por %p118, %p119
      %p121 = scmp.ne.s32.totalorder %s112, %s113
      %p122 = scmp.eq.s32.totalorder %s27, 0
      %p123 = por %p121, %p122
      %p124 = scmp.ne.s32.totalorder %s112, %s113
      %p125 = scmp.eq.s32.totalorder %s28, 1
      %p126 = por %p124, %p125
      %p128 = scmp.ne.s32.totalorder %s113, %s127
      %p129 = scmp.eq.s32.totalorder %s28, 0
      %p130 = por %p128, %p129
      %s132 = sadd.s32 %s131, 1
      %p135 = scmp.eq.s32.totalorder %s22, 1
      %p136 = scmp.ne.s32.totalorder %s131, %s133
      %p137 = scmp.eq.s32.totalorder %s22, 0
      %p138 = por %p136, %p137
      %p139 = scmp.ne.s32.totalorder %s131, %s133
      %p140 = scmp.eq.s32.totalorder %s27, 1
      %p141 = por %p139, %p140
      %p142 = scmp.ne.s32.totalorder %s133, %s134
      %p143 = scmp.eq.s32.totalorder %s27, 0
      %p144 = por %p142, %p143
      %p145 = scmp.ne.s32.totalorder %s133, %s134
      %p146 = scmp.eq.s32.totalorder %s28, 1
      %p147 = por %p145, %p146
      %p149 = scmp.ne.s32.totalorder %s134, %s148
      %p150 = scmp.eq.s32.totalorder %s28, 0
      %p151 = por %p149, %p150
      %s152 = ssub.s32 %s30, %s37
      %p153 = scmp.eq.s32.totalorder %s152, 0
      %s155 = sadd.s32 %s154, 1
      %s156 = scalar_select %p153, %s154, %s155
      %p159 = pneg %p153
      %p160 = scmp.eq.s32.totalorder %s22, 1
      %p161 = por %p159, %p160
      %p162 = scmp.ne.s32.totalorder %s154, %s157
      %p163 = scmp.eq.s32.totalorder %s22, 0
      %p164 = por %p162, %p163
      %p165 = scmp.ne.s32.totalorder %s154, %s157
      %p166 = scmp.eq.s32.totalorder %s27, 1
      %p167 = por %p165, %p166
      %p168 = scmp.ne.s32.totalorder %s157, %s158
      %p169 = scmp.eq.s32.totalorder %s27, 0
      %p170 = por %p168, %p169
      %p171 = scmp.ne.s32.totalorder %s157, %s158
      %p172 = scmp.eq.s32.totalorder %s28, 1
      %p173 = por %p171, %p172
      %p175 = scmp.ne.s32.totalorder %s158, %s174
      %p176 = scmp.eq.s32.totalorder %s28, 0
      %p177 = por %p175, %p176
      %s178 = ssub.s32 %s30, %s37
      %p179 = scmp.eq.s32.totalorder %s178, 0
      %s181 = sadd.s32 %s180, 1
      %s182 = scalar_select %p179, %s180, %s181
      %p185 = pneg %p179
      %p186 = scmp.eq.s32.totalorder %s22, 1
      %p187 = por %p185, %p186
      %p188 = scmp.ne.s32.totalorder %s180, %s183
      %p189 = scmp.eq.s32.totalorder %s22, 0
      %p190 = por %p188, %p189
      %p191 = scmp.ne.s32.totalorder %s180, %s183
      %p192 = scmp.eq.s32.totalorder %s27, 1
      %p193 = por %p191, %p192
      %p194 = scmp.ne.s32.totalorder %s183, %s184
      %p195 = scmp.eq.s32.totalorder %s27, 0
      %p196 = por %p194, %p195
      %p197 = scmp.ne.s32.totalorder %s183, %s184
      %p198 = scmp.eq.s32.totalorder %s28, 1
      %p199 = por %p197, %p198
      %p201 = scmp.ne.s32.totalorder %s184, %s200
      %p202 = scmp.eq.s32.totalorder %s28, 0
      %p203 = por %p201, %p202
      %s204 = ssub.s32 %s29, %s41
      %s205 = ssub.s32 %s30, %s37
      %s206 = sor.u32 %s204, %s205
      %p207 = scmp.eq.s32.totalorder %s206, 0
      %s209 = sadd.s32 %s208, 1
      %s210 = scalar_select %p207, %s208, %s209
      %p213 = pneg %p207
      %p214 = scmp.eq.s32.totalorder %s22, 1
      %p215 = por %p213, %p214
      %p216 = scmp.ne.s32.totalorder %s208, %s211
      %p217 = scmp.eq.s32.totalorder %s22, 0
      %p218 = por %p216, %p217
      %p219 = scmp.ne.s32.totalorder %s208, %s211
      %p220 = scmp.eq.s32.totalorder %s27, 1
      %p221 = por %p219, %p220
      %p222 = scmp.ne.s32.totalorder %s211, %s212
      %p223 = scmp.eq.s32.totalorder %s27, 0
      %p224 = por %p222, %p223
      %p225 = scmp.ne.s32.totalorder %s211, %s212
      %p226 = scmp.eq.s32.totalorder %s28, 1
      %p227 = por %p225, %p226
      %p229 = scmp.ne.s32.totalorder %s212, %s228
      %p230 = scmp.eq.s32.totalorder %s28, 0
      %p231 = por %p229, %p230
      %p232 = scmp.le.s32.totalorder 1, %s22
      %p233 = scmp.lt.s32.totalorder %s22, 3
      %p234 = pnand %p232, %p233
      %p235 = pneg %p234
      // Predicated region
      $region9: #{tpu_custom_call.1} parent=5 // pred_check
        _
      $region10: #{tpu_custom_call.1} parent=5 // pred_check_branch
        %237 = sbr.rel (%p234) target = $region12
      $region11: #{tpu_custom_call.1} parent=5 // pred_region
        %s238 = ssub.s32 %s22, 1
        // Predicated region
        $region13: #{tpu_custom_call.1} parent=11 // pred_check
          %p239 = pneg %p81
        $region14: #{tpu_custom_call.1} parent=11 // pred_check_branch
          %241 = sbr.rel (%p239) target = $region16
        $region15: #{tpu_custom_call.1} parent=11 // pred_region
          %243 = vsyncadd [#allocation7], 0
          %s244 = sshll.u32 %s1, 4
          %s245 = int_to_ptr.hbm [resolvable:$true] %s244
          %s246 = sshll.u32 [#allocation6], 4
          %s247 = int_to_ptr.vmem [resolvable:$true] %s246
          %252 = dma.hbm_to_vmem [thread:$0]  %s245, 4096, %s247, [#allocation7], 128, 128, 8
        $region16: #{tpu_custom_call.1} parent=11 // pred_fallthru
          _
        // Predicated region
        $region17: #{tpu_custom_call.1} parent=11 // pred_check
          %p253 = pneg %p102
        $region18: #{tpu_custom_call.1} parent=11 // pred_check_branch
          %255 = sbr.rel (%p253) target = $region20
        $region19: #{tpu_custom_call.1} parent=11 // pred_region
          %257 = vsyncadd [#allocation7], 0
          %s259 = sshll.u32 %s2, 4
          %s260 = int_to_ptr.hbm [resolvable:$true] %s259
          %s261 = sshll.u32 [#allocation8], 4
          %s262 = int_to_ptr.vmem [resolvable:$true] %s261
          %264 = dma.hbm_to_vmem [thread:$0]  %s260, 32, %s262, [#allocation7]
        $region20: #{tpu_custom_call.1} parent=11 // pred_fallthru
          _
        // Predicated region
        $region21: #{tpu_custom_call.1} parent=11 // pred_check
          %p265 = pneg %p123
        $region22: #{tpu_custom_call.1} parent=11 // pred_check_branch
          %267 = sbr.rel (%p265) target = $region24
        $region23: #{tpu_custom_call.1} parent=11 // pred_region
          _
        $region24: #{tpu_custom_call.1} parent=11 // pred_fallthru
          _
        // Predicated region
        $region25: #{tpu_custom_call.1} parent=11 // pred_check
          %p268 = pneg %p144
        $region26: #{tpu_custom_call.1} parent=11 // pred_check_branch
          %270 = sbr.rel (%p268) target = $region28
        $region27: #{tpu_custom_call.1} parent=11 // pred_region
          %272 = vsyncadd [#allocation10], 0
          %s274 = sshll.u32 %s4, 4
          %s275 = int_to_ptr.hbm [resolvable:$true] %s274
          %s276 = sshll.u32 [#allocation9], 4
          %s277 = int_to_ptr.vmem [resolvable:$true] %s276
          %279 = dma.hbm_to_vmem [thread:$0]  %s275, 32, %s277, [#allocation10]
        $region28: #{tpu_custom_call.1} parent=11 // pred_fallthru
          _
        // Predicated region
        $region29: #{tpu_custom_call.1} parent=11 // pred_check
          %p280 = pneg %p170
        $region30: #{tpu_custom_call.1} parent=11 // pred_check_branch
          %282 = sbr.rel (%p280) target = $region32
        $region31: #{tpu_custom_call.1} parent=11 // pred_region
          %s283 = smul.u32 8, %s32
          %285 = vsyncadd [#allocation10], 0
          %s286 = smul.addr %s283, 4
          %s287 = scalar_lea.hbm %s5, %s286
          %s288 = sshll.u32 %s287, 4
          %s289 = int_to_ptr.hbm [resolvable:$true] %s288
          %s290 = sshll.u32 [#allocation11], 4
          %s291 = int_to_ptr.vmem [resolvable:$true] %s290
          %296 = dma.hbm_to_vmem [thread:$0]  %s289, 16384, %s291, [#allocation10], 512, 512, 32
        $region32: #{tpu_custom_call.1} parent=11 // pred_fallthru
          _
        // Predicated region
        $region33: #{tpu_custom_call.1} parent=11 // pred_check
          %p297 = pneg %p196
        $region34: #{tpu_custom_call.1} parent=11 // pred_check_branch
          %299 = sbr.rel (%p297) target = $region36
        $region35: #{tpu_custom_call.1} parent=11 // pred_region
          %s300 = smul.u32 8, %s32
          %302 = vsyncadd [#allocation13], 0
          %s303 = scalar_lea.hbm %s6, %s300
          %s305 = sshll.u32 %s303, 4
          %s306 = int_to_ptr.hbm [resolvable:$true] %s305
          %s307 = sshll.u32 [#allocation12], 4
          %s308 = int_to_ptr.vmem [resolvable:$true] %s307
          %310 = dma.hbm_to_vmem [thread:$0]  %s306, 128, %s308, [#allocation13]
        $region36: #{tpu_custom_call.1} parent=11 // pred_fallthru
          _
      $region12: #{tpu_custom_call.1} parent=5 // pred_fallthru
        _
      %p311 = scmp.lt.s32.totalorder %s22, 2
      // Predicated region
      $region37: #{tpu_custom_call.1} parent=5 // pred_check
        %p312 = pneg %p311
      $region38: #{tpu_custom_call.1} parent=5 // pred_check_branch
        %314 = sbr.rel (%p312) target = $region40
      $region39: #{tpu_custom_call.1} parent=5 // pred_region
        // Predicated region
        $region41: #{tpu_custom_call.1} parent=39 // pred_check
          %p315 = pneg %p54
        $region42: #{tpu_custom_call.1} parent=39 // pred_check_branch
          %317 = sbr.rel (%p315) target = $region44
        $region43: #{tpu_custom_call.1} parent=39 // pred_region
          %s318 = sand.u32 %s44, 1
          %s319 = scalar_lea.sflag [#allocation4], %s318
          %s320 = sand.u32 %s44, 1
          %s321 = smul.addr %s320, 8
          %s322 = scalar_lea.vmem [#allocation3], %s321
          %324 = vsyncadd %s319, 0
          %s325 = smul.addr %s29, 2
          %s326 = smul.addr %s325, 4
          %s327 = scalar_lea.hbm %s0, %s326
          %s329 = sshll.u32 %s327, 4
          %s330 = int_to_ptr.hbm [resolvable:$true] %s329
          %s331 = sshll.u32 %s322, 4
          %s332 = int_to_ptr.vmem [resolvable:$true] %s331
          %334 = dma.hbm_to_vmem [thread:$0]  %s330, 128, %s332, %s319
        $region44: #{tpu_custom_call.1} parent=39 // pred_fallthru
          _
      $region40: #{tpu_custom_call.1} parent=5 // pred_fallthru
        _
      %p335 = scmp.le.s32.totalorder 1, %s22
      %p336 = scmp.lt.s32.totalorder %s22, 3
      %p337 = pnand %p335, %p336
      %p338 = pneg %p337
      // Predicated region
      $region45: #{tpu_custom_call.1} parent=5 // pred_check
        _
      $region46: #{tpu_custom_call.1} parent=5 // pred_check_branch
        %340 = sbr.rel (%p337) target = $region48
      $region47: #{tpu_custom_call.1} parent=5 // pred_region
        %s341 = ssub.s32 %s22, 1
        %s342 = sand.u32 %s47, 1
        %s343 = scalar_lea.sflag [#allocation4], %s342
        %s344 = sand.u32 %s47, 1
        %s345 = smul.addr %s344, 8
        %s346 = scalar_lea.vmem [#allocation3], %s345
        // Predicated region
        $region49: #{tpu_custom_call.1} parent=47 // pred_check
          %p347 = pneg %p60
        $region50: #{tpu_custom_call.1} parent=47 // pred_check_branch
          %349 = sbr.rel (%p347) target = $region52
        $region51: #{tpu_custom_call.1} parent=47 // pred_region
          %351 = dma.done %s343, 128
        $region52: #{tpu_custom_call.1} parent=47 // pred_fallthru
          _
        // Predicated region
        $region53: #{tpu_custom_call.1} parent=47 // pred_check
          %p352 = pneg %p81
        $region54: #{tpu_custom_call.1} parent=47 // pred_check_branch
          %354 = sbr.rel (%p352) target = $region56
        $region55: #{tpu_custom_call.1} parent=47 // pred_region
          %356 = dma.done [#allocation7], 4096
        $region56: #{tpu_custom_call.1} parent=47 // pred_fallthru
          _
        // Predicated region
        $region57: #{tpu_custom_call.1} parent=47 // pred_check
          %p357 = pneg %p102
        $region58: #{tpu_custom_call.1} parent=47 // pred_check_branch
          %359 = sbr.rel (%p357) target = $region60
        $region59: #{tpu_custom_call.1} parent=47 // pred_region
          %361 = dma.done [#allocation7], 32
        $region60: #{tpu_custom_call.1} parent=47 // pred_fallthru
          _
        // Predicated region
        $region61: #{tpu_custom_call.1} parent=47 // pred_check
          %p362 = pneg %p144
        $region62: #{tpu_custom_call.1} parent=47 // pred_check_branch
          %364 = sbr.rel (%p362) target = $region64
        $region63: #{tpu_custom_call.1} parent=47 // pred_region
          %366 = dma.done [#allocation10], 32
        $region64: #{tpu_custom_call.1} parent=47 // pred_fallthru
          _
        // Predicated region
        $region65: #{tpu_custom_call.1} parent=47 // pred_check
          %p367 = pneg %p170
        $region66: #{tpu_custom_call.1} parent=47 // pred_check_branch
          %369 = sbr.rel (%p367) target = $region68
        $region67: #{tpu_custom_call.1} parent=47 // pred_region
          %371 = dma.done [#allocation10], 16384
        $region68: #{tpu_custom_call.1} parent=47 // pred_fallthru
          _
        // Predicated region
        $region69: #{tpu_custom_call.1} parent=47 // pred_check
          %p372 = pneg %p196
        $region70: #{tpu_custom_call.1} parent=47 // pred_check_branch
          %374 = sbr.rel (%p372) target = $region72
        $region71: #{tpu_custom_call.1} parent=47 // pred_region
          %376 = dma.done [#allocation13], 128
        $region72: #{tpu_custom_call.1} parent=47 // pred_fallthru
          _
        %s377 = sand.u32 %s47, 1
        %s378 = scalar_lea.sflag [#allocation4], %s377
        %s379 = sand.u32 %s47, 1
        %s380 = smul.addr %s379, 8
        %s381 = scalar_lea.vmem [#allocation3], %s380
        %p382 = pneg %p60
        %p383 = pneg %p57
        %p384 = pneg %p81
        %p385 = pneg %p78
        %p386 = pneg %p102
        %p387 = pneg %p99
        %p388 = pneg %p123
        %p389 = pneg %p120
        %p390 = pneg %p144
        %p391 = pneg %p141
        %p392 = pneg %p170
        %p393 = pneg %p167
        %p394 = pneg %p196
        %p395 = pneg %p193
        %p396 = pneg %p224
        %p397 = pneg %p221
        %s398 = sand.u32 %s211, 1
        %s399 = scalar_lea.sflag [#allocation5], %s398
        %s400 = sand.u32 %s211, 1
        %s401 = smul.addr %s400, 64
        %s402 = scalar_lea.vmem [#allocation14], %s401
        %s403 = smul.u32 8, %s32
        %s404 = smul.u32 8, %s32
        %s405 = smul.u32 8, %s32
        %p406 = scmp.eq.s32.totalorder %s32, 0
        // Predicated region
        $region73: #{tpu_custom_call.1} parent=47 // pred_check
          %p407 = pneg %p406
        $region74: #{tpu_custom_call.1} parent=47 // pred_check_branch
          %409 = sbr.rel (%p407) target = $region76
        $region75: #{tpu_custom_call.1} parent=47 // pred_region
          %v410 = vld [vmem:[%s346] sm:$0xff]
          %v411 = vld [vmem:[#allocation6] sm:$0xff]
          %v412 = vld [vmem:[#allocation6 + $0x8] sm:$0xff]
          %v413 = vld [vmem:[#allocation6 + $0x10] sm:$0xff]
          %v414 = vld [vmem:[#allocation6 + $0x18] sm:$0xff]
          %v415 = vld [vmem:[#allocation6 + $0x20] sm:$0xff]
          %v416 = vld [vmem:[#allocation6 + $0x28] sm:$0xff]
          %v417 = vld [vmem:[#allocation6 + $0x30] sm:$0xff]
          %v418 = vld [vmem:[#allocation6 + $0x38] sm:$0xff]
          %v419 = vld [vmem:[#allocation6 + $0x40] sm:$0xff]
          %v420 = vld [vmem:[#allocation6 + $0x48] sm:$0xff]
          %v421 = vld [vmem:[#allocation6 + $0x50] sm:$0xff]
          %v422 = vld [vmem:[#allocation6 + $0x58] sm:$0xff]
          %v423 = vld [vmem:[#allocation6 + $0x60] sm:$0xff]
          %v424 = vld [vmem:[#allocation6 + $0x68] sm:$0xff]
          %v425 = vld [vmem:[#allocation6 + $0x70] sm:$0xff]
          %v426 = vld [vmem:[#allocation6 + $0x78] sm:$0xff]
          %v427 = vld [vmem:[#allocation6 + $0x80] sm:$0xff]
          %v428 = vld [vmem:[#allocation6 + $0x88] sm:$0xff]
          %v429 = vld [vmem:[#allocation6 + $0x90] sm:$0xff]
          %v430 = vld [vmem:[#allocation6 + $0x98] sm:$0xff]
          %v431 = vld [vmem:[#allocation6 + $0xa0] sm:$0xff]
          %v432 = vld [vmem:[#allocation6 + $0xa8] sm:$0xff]
          %v433 = vld [vmem:[#allocation6 + $0xb0] sm:$0xff]
          %v434 = vld [vmem:[#allocation6 + $0xb8] sm:$0xff]
          %v435 = vld [vmem:[#allocation6 + $0xc0] sm:$0xff]
          %v436 = vld [vmem:[#allocation6 + $0xc8] sm:$0xff]
          %v437 = vld [vmem:[#allocation6 + $0xd0] sm:$0xff]
          %v438 = vld [vmem:[#allocation6 + $0xd8] sm:$0xff]
          %v439 = vld [vmem:[#allocation6 + $0xe0] sm:$0xff]
          %v440 = vld [vmem:[#allocation6 + $0xe8] sm:$0xff]
          %v441 = vld [vmem:[#allocation6 + $0xf0] sm:$0xff]
          %v442 = vld [vmem:[#allocation6 + $0xf8] sm:$0xff]
          %v443 = vld [vmem:[#allocation8] sm:$0x3]
          %v445 = vperm.slane %v443, 0
          %v446 = vperm.slane %v443, 1
          %v450 = vunpack.c.l.b16 %v410
          %v451 = vunpack.c.h.b16 %v410
          %v452 = vpack.c.b16 %v450, %v450
          %v453 = vpack.c.b16 %v451, %v451
          %v488 = vunpack.c.l.b16 %v411
          %v489 = vunpack.c.h.b16 %v411
          %v490 = vunpack.c.l.b16 %v412
          %v491 = vunpack.c.h.b16 %v412
          %v492 = vunpack.c.l.b16 %v413
          %v493 = vunpack.c.h.b16 %v413
          %v494 = vunpack.c.l.b16 %v414
          %v495 = vunpack.c.h.b16 %v414
          %v496 = vunpack.c.l.b16 %v415
          %v497 = vunpack.c.h.b16 %v415
          %v498 = vunpack.c.l.b16 %v416
          %v499 = vunpack.c.h.b16 %v416
          %v500 = vunpack.c.l.b16 %v417
          %v501 = vunpack.c.h.b16 %v417
          %v502 = vunpack.c.l.b16 %v418
          %v503 = vunpack.c.h.b16 %v418
          %v504 = vunpack.c.l.b16 %v419
          %v505 = vunpack.c.h.b16 %v419
          %v506 = vunpack.c.l.b16 %v420
          %v507 = vunpack.c.h.b16 %v420
          %v508 = vunpack.c.l.b16 %v421
          %v509 = vunpack.c.h.b16 %v421
          %v510 = vunpack.c.l.b16 %v422
          %v511 = vunpack.c.h.b16 %v422
          %v512 = vunpack.c.l.b16 %v423
          %v513 = vunpack.c.h.b16 %v423
          %v514 = vunpack.c.l.b16 %v424
          %v515 = vunpack.c.h.b16 %v424
          %v516 = vunpack.c.l.b16 %v425
          %v517 = vunpack.c.h.b16 %v425
          %v518 = vunpack.c.l.b16 %v426
          %v519 = vunpack.c.h.b16 %v426
          %v520 = vunpack.c.l.b16 %v427
          %v521 = vunpack.c.h.b16 %v427
          %v522 = vunpack.c.l.b16 %v428
          %v523 = vunpack.c.h.b16 %v428
          %v524 = vunpack.c.l.b16 %v429
          %v525 = vunpack.c.h.b16 %v429
          %v526 = vunpack.c.l.b16 %v430
          %v527 = vunpack.c.h.b16 %v430
          %v528 = vunpack.c.l.b16 %v431
          %v529 = vunpack.c.h.b16 %v431
          %v530 = vunpack.c.l.b16 %v432
          %v531 = vunpack.c.h.b16 %v432
          %v532 = vunpack.c.l.b16 %v433
          %v533 = vunpack.c.h.b16 %v433
          %v534 = vunpack.c.l.b16 %v434
          %v535 = vunpack.c.h.b16 %v434
          %v536 = vunpack.c.l.b16 %v435
          %v537 = vunpack.c.h.b16 %v435
          %v538 = vunpack.c.l.b16 %v436
          %v539 = vunpack.c.h.b16 %v436
          %v540 = vunpack.c.l.b16 %v437
          %v541 = vunpack.c.h.b16 %v437
          %v542 = vunpack.c.l.b16 %v438
          %v543 = vunpack.c.h.b16 %v438
          %v544 = vunpack.c.l.b16 %v439
          %v545 = vunpack.c.h.b16 %v439
          %v546 = vunpack.c.l.b16 %v440
          %v547 = vunpack.c.h.b16 %v440
          %v548 = vunpack.c.l.b16 %v441
          %v549 = vunpack.c.h.b16 %v441
          %v550 = vunpack.c.l.b16 %v442
          %v551 = vunpack.c.h.b16 %v442
          %v552 = vpack.c.b16 %v490, %v488
          %v553 = vpack.c.b16 %v491, %v489
          %v554 = vpack.c.b16 %v494, %v492
          %v555 = vpack.c.b16 %v495, %v493
          %v556 = vpack.c.b16 %v498, %v496
          %v557 = vpack.c.b16 %v499, %v497
          %v558 = vpack.c.b16 %v502, %v500
          %v559 = vpack.c.b16 %v503, %v501
          %v560 = vpack.c.b16 %v506, %v504
          %v561 = vpack.c.b16 %v507, %v505
          %v562 = vpack.c.b16 %v510, %v508
          %v563 = vpack.c.b16 %v511, %v509
          %v564 = vpack.c.b16 %v514, %v512
          %v565 = vpack.c.b16 %v515, %v513
          %v566 = vpack.c.b16 %v518, %v516
          %v567 = vpack.c.b16 %v519, %v517
          %v568 = vpack.c.b16 %v522, %v520
          %v569 = vpack.c.b16 %v523, %v521
          %v570 = vpack.c.b16 %v526, %v524
          %v571 = vpack.c.b16 %v527, %v525
          %v572 = vpack.c.b16 %v530, %v528
          %v573 = vpack.c.b16 %v531, %v529
          %v574 = vpack.c.b16 %v534, %v532
          %v575 = vpack.c.b16 %v535, %v533
          %v576 = vpack.c.b16 %v538, %v536
          %v577 = vpack.c.b16 %v539, %v537
          %v578 = vpack.c.b16 %v542, %v540
          %v579 = vpack.c.b16 %v543, %v541
          %v580 = vpack.c.b16 %v546, %v544
          %v581 = vpack.c.b16 %v547, %v545
          %v582 = vpack.c.b16 %v550, %v548
          %v583 = vpack.c.b16 %v551, %v549
          %616 = vmatpush.bf16.msra.mxu0 %v566
          %617 = vmatpush.bf16.msra.mxu0 %v564
          %618 = vmatpush.bf16.msra.mxu0 %v562
          %619 = vmatpush.bf16.msra.mxu0 %v560
          %620 = vmatpush.bf16.msra.mxu0 %v558
          %621 = vmatpush.bf16.msra.mxu0 %v556
          %622 = vmatpush.bf16.msra.mxu0 %v554
          %623 = vmatpush.bf16.msra.mxu0 %v552
          %624 = vmatmul.bf16.gmra.mxu0 %v452
          %v625 = vpop.f32.mrf.mxu0
          %v626 = vadd.f32 %v445, %v625
          %v627 = vpop.f32.mrf.mxu0
          %628 = vdwg.mxu0
          %629 = vmatpush.bf16.msra.mxu0 %v582
          %630 = vmatpush.bf16.msra.mxu0 %v580
          %631 = vmatpush.bf16.msra.mxu0 %v578
          %632 = vmatpush.bf16.msra.mxu0 %v576
          %633 = vmatpush.bf16.msra.mxu0 %v574
          %634 = vmatpush.bf16.msra.mxu0 %v572
          %635 = vmatpush.bf16.msra.mxu0 %v570
          %636 = vmatpush.bf16.msra.mxu0 %v568
          %637 = vmatmul.bf16.gmra.mxu0 %v453
          %v638 = vpop.f32.mrf.mxu0
          %v639 = vadd.f32 %v626, %v638
          %v640 = vpop.f32.mrf.mxu0
          %641 = vdwg.mxu0
          %642 = vmatpush.bf16.msra.mxu0 %v567
          %643 = vmatpush.bf16.msra.mxu0 %v565
          %644 = vmatpush.bf16.msra.mxu0 %v563
          %645 = vmatpush.bf16.msra.mxu0 %v561
          %646 = vmatpush.bf16.msra.mxu0 %v559
          %647 = vmatpush.bf16.msra.mxu0 %v557
          %648 = vmatpush.bf16.msra.mxu0 %v555
          %649 = vmatpush.bf16.msra.mxu0 %v553
          %650 = vmatmul.bf16.gmra.mxu0 %v452
          %v651 = vpop.f32.mrf.mxu0
          %v652 = vadd.f32 %v446, %v651
          %v653 = vpop.f32.mrf.mxu0
          %654 = vdwg.mxu0
          %655 = vmatpush.bf16.msra.mxu0 %v583
          %656 = vmatpush.bf16.msra.mxu0 %v581
          %657 = vmatpush.bf16.msra.mxu0 %v579
          %658 = vmatpush.bf16.msra.mxu0 %v577
          %659 = vmatpush.bf16.msra.mxu0 %v575
          %660 = vmatpush.bf16.msra.mxu0 %v573
          %661 = vmatpush.bf16.msra.mxu0 %v571
          %662 = vmatpush.bf16.msra.mxu0 %v569
          %663 = vmatmul.bf16.gmra.mxu0 %v453
          %v664 = vpop.f32.mrf.mxu0
          %v665 = vadd.f32 %v652, %v664
          %v666 = vpop.f32.mrf.mxu0
          %667 = vdwg.mxu0
          %v668 = vmul.f32 %v639, 0.5
          %v669 = vmul.f32 %v665, 0.5
          %v670 = vmul.f32 %v639, 0.70710677
          %v671 = vmul.f32 %v665, 0.70710677
          %v672 = vmul.f32 %v670, %v670
          %v673 = vmin.f32 16.0, %v672
          %v674 = vmul.f32 %v673, 2.1237322e-06
          %v675 = vadd.f32 %v674, 0.00028619796
          %v676 = vmul.f32 %v673, %v675
          %v677 = vadd.f32 %v676, 0.0036580483
          %v678 = vmul.f32 %v673, %v677
          %v679 = vadd.f32 %v678, 0.05243302
          %v680 = vmul.f32 %v673, %v679
          %v681 = vadd.f32 %v680, 0.18741608
          %v682 = vmul.f32 %v673, %v681
          %v683 = vadd.f32 %v682, 1.1283791
          %v684 = vmul.f32 %v670, %v683
          %v685 = vmul.f32 %v673, 3.8918573e-05
          %v686 = vadd.f32 %v685, 0.001143296
          %v687 = vmul.f32 %v673, %v686
          %v688 = vadd.f32 %v687, 0.014752088
          %v689 = vmul.f32 %v673, %v688
          %v690 = vadd.f32 %v689, 0.112945676
          %v691 = vmul.f32 %v673, %v690
          %v692 = vadd.f32 %v691, 0.4994258
          %v693 = vmul.f32 %v673, %v692
          %v694 = vadd.f32 %v693, 1.0
          %v695 = vrcp.pop %v694
          %v696 = vmul.f32 %v694, %v695
          %v697 = vsub.f32 1.0, %v696
          %v698 = vmul.f32 %v695, %v697
          %v699 = vadd.f32 %v695, %v698
          %vm700 = vweird.f32 %v694
          %vm701 = vweird.f32 %v695
          %vm702 = vmor %vm700, %vm701
          %v703 = vsel %vm702, %v695, %v699
          %v704 = vand.u32 2147483647, %v694
          %vm705 = vcmp.eq.f32.partialorder %v704, 8.507059e+37
          %v706 = vand.u32 %v694, 2147483648
          %v707 = vor.u32 1.1754944e-38, %v706
          %v708 = vsel %vm705, %v707, %v703
          %v709 = vmul.f32 %v684, %v708
          %v710 = vmin.f32 %v709, 1.0
          %v711 = vmax.f32 %v710, -1.0
          %v712 = vmul.f32 %v671, %v671
          %v713 = vmin.f32 16.0, %v712
          %v714 = vmul.f32 %v713, 2.1237322e-06
          %v715 = vadd.f32 %v714, 0.00028619796
          %v716 = vmul.f32 %v713, %v715
          %v717 = vadd.f32 %v716, 0.0036580483
          %v718 = vmul.f32 %v713, %v717
          %v719 = vadd.f32 %v718, 0.05243302
          %v720 = vmul.f32 %v713, %v719
          %v721 = vadd.f32 %v720, 0.18741608
          %v722 = vmul.f32 %v713, %v721
          %v723 = vadd.f32 %v722, 1.1283791
          %v724 = vmul.f32 %v671, %v723
          %v725 = vmul.f32 %v713, 3.8918573e-05
          %v726 = vadd.f32 %v725, 0.001143296
          %v727 = vmul.f32 %v713, %v726
          %v728 = vadd.f32 %v727, 0.014752088
          %v729 = vmul.f32 %v713, %v728
          %v730 = vadd.f32 %v729, 0.112945676
          %v731 = vmul.f32 %v713, %v730
          %v732 = vadd.f32 %v731, 0.4994258
          %v733 = vmul.f32 %v713, %v732
          %v734 = vadd.f32 %v733, 1.0
          %v735 = vrcp.pop %v734
          %v736 = vmul.f32 %v734, %v735
          %v737 = vsub.f32 1.0, %v736
          %v738 = vmul.f32 %v735, %v737
          %v739 = vadd.f32 %v735, %v738
          %vm740 = vweird.f32 %v734
          %vm741 = vweird.f32 %v735
          %vm742 = vmor %vm740, %vm741
          %v743 = vsel %vm742, %v735, %v739
          %v744 = vand.u32 2147483647, %v734
          %vm745 = vcmp.eq.f32.partialorder %v744, 8.507059e+37
          %v746 = vand.u32 %v734, 2147483648
          %v747 = vor.u32 1.1754944e-38, %v746
          %v748 = vsel %vm745, %v747, %v743
          %v749 = vmul.f32 %v724, %v748
          %v750 = vmin.f32 %v749, 1.0
          %v751 = vmax.f32 %v750, -1.0
          %v752 = vadd.f32 %v711, 1.0
          %v753 = vadd.f32 %v751, 1.0
          %v754 = vmul.f32 %v668, %v752
          %v755 = vmul.f32 %v669, %v753
          %v756 = vadd.f32 %v754, %v755
          %757 = vadd.xlane.f32.xlu0 %v756
          %v758 = vpop.xlane.xlu0 %757
          %v759 = vrcp.pop 256.0
          %v760 = vmul.f32 256.0, %v759
          %v761 = vsub.f32 1.0, %v760
          %v762 = vmul.f32 %v759, %v761
          %v763 = vadd.f32 %v759, %v762
          %vm764 = vweird.f32 %v759
          %v765 = vsel %vm764, %v759, %v763
          %v766 = vmul.f32 %v758, %v765
          %v767 = vsub.f32 %v754, %v766
          %v768 = vsub.f32 %v755, %v766
          %v769 = vmul.f32 %v767, %v767
          %v770 = vmul.f32 %v768, %v768
          %v771 = vadd.f32 %v769, %v770
          %772 = vadd.xlane.f32.xlu0 %v771
          %v773 = vpop.xlane.xlu0 %772
          %v774 = vmul.f32 %v773, %v765
          %v775 = vadd.f32 %v774, 1e-12
          %v776 = vrsqrt.pop %v775
          %v777 = vmul.f32 %v776, %v775
          %v778 = vmul.f32 %v777, %v776
          %v779 = vmul.f32 0.5, %v778
          %v780 = vsub.f32 1.5, %v779
          %v781 = vmul.f32 %v776, %v780
          %vm782 = vweird.f32 %v775
          %vm783 = vweird.f32 %v776
          %vm784 = vmor %vm782, %vm783
          %v785 = vsel %vm784, %v776, %v781
          %v786 = vmul.f32 %v767, %v785
          %v787 = vmul.f32 %v768, %v785
          %v788 = vld [vmem:[%s3] sm:$0x3]
          %v790 = vperm.slane %v788, 0
          %v791 = vperm.slane %v788, 1
          %v794 = vmul.f32 %v786, %v790
          %v795 = vmul.f32 %v787, %v791
          %v796 = vld [vmem:[#allocation9] sm:$0x3]
          %v798 = vperm.slane %v796, 0
          %v799 = vperm.slane %v796, 1
          %v802 = vadd.f32 %v794, %v798
          %v803 = vadd.f32 %v795, %v799
          %v804 = vpack.c.bf16 %v803, %v802
          %805 = vst [vmem:[#allocation2] sm:$0xff] %v804
        $region76: #{tpu_custom_call.1} parent=47 // pred_fallthru
          _
        %v806 = vld [vmem:[#allocation2] sm:$0xff]
        %v807 = vld [vmem:[#allocation11] sm:$0xff]
        %v808 = vld [vmem:[#allocation11 + $0x8] sm:$0xff]
        %v809 = vld [vmem:[#allocation11 + $0x10] sm:$0xff]
        %v810 = vld [vmem:[#allocation11 + $0x18] sm:$0xff]
        %v811 = vld [vmem:[#allocation11 + $0x20] sm:$0xff]
        %v812 = vld [vmem:[#allocation11 + $0x28] sm:$0xff]
        %v813 = vld [vmem:[#allocation11 + $0x30] sm:$0xff]
        %v814 = vld [vmem:[#allocation11 + $0x38] sm:$0xff]
        %v815 = vld [vmem:[#allocation11 + $0x40] sm:$0xff]
        %v816 = vld [vmem:[#allocation11 + $0x48] sm:$0xff]
        %v817 = vld [vmem:[#allocation11 + $0x50] sm:$0xff]
        %v818 = vld [vmem:[#allocation11 + $0x58] sm:$0xff]
        %v819 = vld [vmem:[#allocation11 + $0x60] sm:$0xff]
        %v820 = vld [vmem:[#allocation11 + $0x68] sm:$0xff]
        %v821 = vld [vmem:[#allocation11 + $0x70] sm:$0xff]
        %v822 = vld [vmem:[#allocation11 + $0x78] sm:$0xff]
        %v823 = vld [vmem:[#allocation11 + $0x80] sm:$0xff]
        %v824 = vld [vmem:[#allocation11 + $0x88] sm:$0xff]
        %v825 = vld [vmem:[#allocation11 + $0x90] sm:$0xff]
        %v826 = vld [vmem:[#allocation11 + $0x98] sm:$0xff]
        %v827 = vld [vmem:[#allocation11 + $0xa0] sm:$0xff]
        %v828 = vld [vmem:[#allocation11 + $0xa8] sm:$0xff]
        %v829 = vld [vmem:[#allocation11 + $0xb0] sm:$0xff]
        %v830 = vld [vmem:[#allocation11 + $0xb8] sm:$0xff]
        %v831 = vld [vmem:[#allocation11 + $0xc0] sm:$0xff]
        %v832 = vld [vmem:[#allocation11 + $0xc8] sm:$0xff]
        %v833 = vld [vmem:[#allocation11 + $0xd0] sm:$0xff]
        %v834 = vld [vmem:[#allocation11 + $0xd8] sm:$0xff]
        %v835 = vld [vmem:[#allocation11 + $0xe0] sm:$0xff]
        %v836 = vld [vmem:[#allocation11 + $0xe8] sm:$0xff]
        %v837 = vld [vmem:[#allocation11 + $0xf0] sm:$0xff]
        %v838 = vld [vmem:[#allocation11 + $0xf8] sm:$0xff]
        %v839 = vld [vmem:[#allocation11 + $0x100] sm:$0xff]
        %v840 = vld [vmem:[#allocation11 + $0x108] sm:$0xff]
        %v841 = vld [vmem:[#allocation11 + $0x110] sm:$0xff]
        %v842 = vld [vmem:[#allocation11 + $0x118] sm:$0xff]
        %v843 = vld [vmem:[#allocation11 + $0x120] sm:$0xff]
        %v844 = vld [vmem:[#allocation11 + $0x128] sm:$0xff]
        %v845 = vld [vmem:[#allocation11 + $0x130] sm:$0xff]
        %v846 = vld [vmem:[#allocation11 + $0x138] sm:$0xff]
        %v847 = vld [vmem:[#allocation11 + $0x140] sm:$0xff]
        %v848 = vld [vmem:[#allocation11 + $0x148] sm:$0xff]
        %v849 = vld [vmem:[#allocation11 + $0x150] sm:$0xff]
        %v850 = vld [vmem:[#allocation11 + $0x158] sm:$0xff]
        %v851 = vld [vmem:[#allocation11 + $0x160] sm:$0xff]
        %v852 = vld [vmem:[#allocation11 + $0x168] sm:$0xff]
        %v853 = vld [vmem:[#allocation11 + $0x170] sm:$0xff]
        %v854 = vld [vmem:[#allocation11 + $0x178] sm:$0xff]
        %v855 = vld [vmem:[#allocation11 + $0x180] sm:$0xff]
        %v856 = vld [vmem:[#allocation11 + $0x188] sm:$0xff]
        %v857 = vld [vmem:[#allocation11 + $0x190] sm:$0xff]
        %v858 = vld [vmem:[#allocation11 + $0x198] sm:$0xff]
        %v859 = vld [vmem:[#allocation11 + $0x1a0] sm:$0xff]
        %v860 = vld [vmem:[#allocation11 + $0x1a8] sm:$0xff]
        %v861 = vld [vmem:[#allocation11 + $0x1b0] sm:$0xff]
        %v862 = vld [vmem:[#allocation11 + $0x1b8] sm:$0xff]
        %v863 = vld [vmem:[#allocation11 + $0x1c0] sm:$0xff]
        %v864 = vld [vmem:[#allocation11 + $0x1c8] sm:$0xff]
        %v865 = vld [vmem:[#allocation11 + $0x1d0] sm:$0xff]
        %v866 = vld [vmem:[#allocation11 + $0x1d8] sm:$0xff]
        %v867 = vld [vmem:[#allocation11 + $0x1e0] sm:$0xff]
        %v868 = vld [vmem:[#allocation11 + $0x1e8] sm:$0xff]
        %v869 = vld [vmem:[#allocation11 + $0x1f0] sm:$0xff]
        %v870 = vld [vmem:[#allocation11 + $0x1f8] sm:$0xff]
        %v871 = vld [vmem:[#allocation11 + $0x200] sm:$0xff]
        %v872 = vld [vmem:[#allocation11 + $0x208] sm:$0xff]
        %v873 = vld [vmem:[#allocation11 + $0x210] sm:$0xff]
        %v874 = vld [vmem:[#allocation11 + $0x218] sm:$0xff]
        %v875 = vld [vmem:[#allocation11 + $0x220] sm:$0xff]
        %v876 = vld [vmem:[#allocation11 + $0x228] sm:$0xff]
        %v877 = vld [vmem:[#allocation11 + $0x230] sm:$0xff]
        %v878 = vld [vmem:[#allocation11 + $0x238] sm:$0xff]
        %v879 = vld [vmem:[#allocation11 + $0x240] sm:$0xff]
        %v880 = vld [vmem:[#allocation11 + $0x248] sm:$0xff]
        %v881 = vld [vmem:[#allocation11 + $0x250] sm:$0xff]
        %v882 = vld [vmem:[#allocation11 + $0x258] sm:$0xff]
        %v883 = vld [vmem:[#allocation11 + $0x260] sm:$0xff]
        %v884 = vld [vmem:[#allocation11 + $0x268] sm:$0xff]
        %v885 = vld [vmem:[#allocation11 + $0x270] sm:$0xff]
        %v886 = vld [vmem:[#allocation11 + $0x278] sm:$0xff]
        %v887 = vld [vmem:[#allocation11 + $0x280] sm:$0xff]
        %v888 = vld [vmem:[#allocation11 + $0x288] sm:$0xff]
        %v889 = vld [vmem:[#allocation11 + $0x290] sm:$0xff]
        %v890 = vld [vmem:[#allocation11 + $0x298] sm:$0xff]
        %v891 = vld [vmem:[#allocation11 + $0x2a0] sm:$0xff]
        %v892 = vld [vmem:[#allocation11 + $0x2a8] sm:$0xff]
        %v893 = vld [vmem:[#allocation11 + $0x2b0] sm:$0xff]
        %v894 = vld [vmem:[#allocation11 + $0x2b8] sm:$0xff]
        %v895 = vld [vmem:[#allocation11 + $0x2c0] sm:$0xff]
        %v896 = vld [vmem:[#allocation11 + $0x2c8] sm:$0xff]
        %v897 = vld [vmem:[#allocation11 + $0x2d0] sm:$0xff]
        %v898 = vld [vmem:[#allocation11 + $0x2d8] sm:$0xff]
        %v899 = vld [vmem:[#allocation11 + $0x2e0] sm:$0xff]
        %v900 = vld [vmem:[#allocation11 + $0x2e8] sm:$0xff]
        %v901 = vld [vmem:[#allocation11 + $0x2f0] sm:$0xff]
        %v902 = vld [vmem:[#allocation11 + $0x2f8] sm:$0xff]
        %v903 = vld [vmem:[#allocation11 + $0x300] sm:$0xff]
        %v904 = vld [vmem:[#allocation11 + $0x308] sm:$0xff]
        %v905 = vld [vmem:[#allocation11 + $0x310] sm:$0xff]
        %v906 = vld [vmem:[#allocation11 + $0x318] sm:$0xff]
        %v907 = vld [vmem:[#allocation11 + $0x320] sm:$0xff]
        %v908 = vld [vmem:[#allocation11 + $0x328] sm:$0xff]
        %v909 = vld [vmem:[#allocation11 + $0x330] sm:$0xff]
        %v910 = vld [vmem:[#allocation11 + $0x338] sm:$0xff]
        %v911 = vld [vmem:[#allocation11 + $0x340] sm:$0xff]
        %v912 = vld [vmem:[#allocation11 + $0x348] sm:$0xff]
        %v913 = vld [vmem:[#allocation11 + $0x350] sm:$0xff]
        %v914 = vld [vmem:[#allocation11 + $0x358] sm:$0xff]
        %v915 = vld [vmem:[#allocation11 + $0x360] sm:$0xff]
        %v916 = vld [vmem:[#allocation11 + $0x368] sm:$0xff]
        %v917 = vld [vmem:[#allocation11 + $0x370] sm:$0xff]
        %v918 = vld [vmem:[#allocation11 + $0x378] sm:$0xff]
        %v919 = vld [vmem:[#allocation11 + $0x380] sm:$0xff]
        %v920 = vld [vmem:[#allocation11 + $0x388] sm:$0xff]
        %v921 = vld [vmem:[#allocation11 + $0x390] sm:$0xff]
        %v922 = vld [vmem:[#allocation11 + $0x398] sm:$0xff]
        %v923 = vld [vmem:[#allocation11 + $0x3a0] sm:$0xff]
        %v924 = vld [vmem:[#allocation11 + $0x3a8] sm:$0xff]
        %v925 = vld [vmem:[#allocation11 + $0x3b0] sm:$0xff]
        %v926 = vld [vmem:[#allocation11 + $0x3b8] sm:$0xff]
        %v927 = vld [vmem:[#allocation11 + $0x3c0] sm:$0xff]
        %v928 = vld [vmem:[#allocation11 + $0x3c8] sm:$0xff]
        %v929 = vld [vmem:[#allocation11 + $0x3d0] sm:$0xff]
        %v930 = vld [vmem:[#allocation11 + $0x3d8] sm:$0xff]
        %v931 = vld [vmem:[#allocation11 + $0x3e0] sm:$0xff]
        %v932 = vld [vmem:[#allocation11 + $0x3e8] sm:$0xff]
        %v933 = vld [vmem:[#allocation11 + $0x3f0] sm:$0xff]
        %v934 = vld [vmem:[#allocation11 + $0x3f8] sm:$0xff]
        %v935 = vld [vmem:[#allocation12] sm:$0xff]
        %v937 = vperm.slane %v935, 0
        %v938 = vperm.slane %v935, 1
        %v939 = vperm.slane %v935, 2
        %v940 = vperm.slane %v935, 3
        %v941 = vperm.slane %v935, 4
        %v942 = vperm.slane %v935, 5
        %v943 = vperm.slane %v935, 6
        %v944 = vperm.slane %v935, 7
        %v954 = vunpack.c.l.b16 %v806
        %v955 = vunpack.c.h.b16 %v806
        %v956 = vpack.c.b16 %v954, %v954
        %v957 = vpack.c.b16 %v955, %v955
        %v1088 = vunpack.c.l.b16 %v807
        %v1089 = vunpack.c.h.b16 %v807
        %v1090 = vunpack.c.l.b16 %v808
        %v1091 = vunpack.c.h.b16 %v808
        %v1092 = vunpack.c.l.b16 %v809
        %v1093 = vunpack.c.h.b16 %v809
        %v1094 = vunpack.c.l.b16 %v810
        %v1095 = vunpack.c.h.b16 %v810
        %v1096 = vunpack.c.l.b16 %v811
        %v1097 = vunpack.c.h.b16 %v811
        %v1098 = vunpack.c.l.b16 %v812
        %v1099 = vunpack.c.h.b16 %v812
        %v1100 = vunpack.c.l.b16 %v813
        %v1101 = vunpack.c.h.b16 %v813
        %v1102 = vunpack.c.l.b16 %v814
        %v1103 = vunpack.c.h.b16 %v814
        %v1104 = vunpack.c.l.b16 %v815
        %v1105 = vunpack.c.h.b16 %v815
        %v1106 = vunpack.c.l.b16 %v816
        %v1107 = vunpack.c.h.b16 %v816
        %v1108 = vunpack.c.l.b16 %v817
        %v1109 = vunpack.c.h.b16 %v817
        %v1110 = vunpack.c.l.b16 %v818
        %v1111 = vunpack.c.h.b16 %v818
        %v1112 = vunpack.c.l.b16 %v819
        %v1113 = vunpack.c.h.b16 %v819
        %v1114 = vunpack.c.l.b16 %v820
        %v1115 = vunpack.c.h.b16 %v820
        %v1116 = vunpack.c.l.b16 %v821
        %v1117 = vunpack.c.h.b16 %v821
        %v1118 = vunpack.c.l.b16 %v822
        %v1119 = vunpack.c.h.b16 %v822
        %v1120 = vunpack.c.l.b16 %v823
        %v1121 = vunpack.c.h.b16 %v823
        %v1122 = vunpack.c.l.b16 %v824
        %v1123 = vunpack.c.h.b16 %v824
        %v1124 = vunpack.c.l.b16 %v825
        %v1125 = vunpack.c.h.b16 %v825
        %v1126 = vunpack.c.l.b16 %v826
        %v1127 = vunpack.c.h.b16 %v826
        %v1128 = vunpack.c.l.b16 %v827
        %v1129 = vunpack.c.h.b16 %v827
        %v1130 = vunpack.c.l.b16 %v828
        %v1131 = vunpack.c.h.b16 %v828
        %v1132 = vunpack.c.l.b16 %v829
        %v1133 = vunpack.c.h.b16 %v829
        %v1134 = vunpack.c.l.b16 %v830
        %v1135 = vunpack.c.h.b16 %v830
        %v1136 = vunpack.c.l.b16 %v831
        %v1137 = vunpack.c.h.b16 %v831
        %v1138 = vunpack.c.l.b16 %v832
        %v1139 = vunpack.c.h.b16 %v832
        %v1140 = vunpack.c.l.b16 %v833
        %v1141 = vunpack.c.h.b16 %v833
        %v1142 = vunpack.c.l.b16 %v834
        %v1143 = vunpack.c.h.b16 %v834
        %v1144 = vunpack.c.l.b16 %v835
        %v1145 = vunpack.c.h.b16 %v835
        %v1146 = vunpack.c.l.b16 %v836
        %v1147 = vunpack.c.h.b16 %v836
        %v1148 = vunpack.c.l.b16 %v837
        %v1149 = vunpack.c.h.b16 %v837
        %v1150 = vunpack.c.l.b16 %v838
        %v1151 = vunpack.c.h.b16 %v838
        %v1152 = vunpack.c.l.b16 %v839
        %v1153 = vunpack.c.h.b16 %v839
        %v1154 = vunpack.c.l.b16 %v840
        %v1155 = vunpack.c.h.b16 %v840
        %v1156 = vunpack.c.l.b16 %v841
        %v1157 = vunpack.c.h.b16 %v841
        %v1158 = vunpack.c.l.b16 %v842
        %v1159 = vunpack.c.h.b16 %v842
        %v1160 = vunpack.c.l.b16 %v843
        %v1161 = vunpack.c.h.b16 %v843
        %v1162 = vunpack.c.l.b16 %v844
        %v1163 = vunpack.c.h.b16 %v844
        %v1164 = vunpack.c.l.b16 %v845
        %v1165 = vunpack.c.h.b16 %v845
        %v1166 = vunpack.c.l.b16 %v846
        %v1167 = vunpack.c.h.b16 %v846
        %v1168 = vunpack.c.l.b16 %v847
        %v1169 = vunpack.c.h.b16 %v847
        %v1170 = vunpack.c.l.b16 %v848
        %v1171 = vunpack.c.h.b16 %v848
        %v1172 = vunpack.c.l.b16 %v849
        %v1173 = vunpack.c.h.b16 %v849
        %v1174 = vunpack.c.l.b16 %v850
        %v1175 = vunpack.c.h.b16 %v850
        %v1176 = vunpack.c.l.b16 %v851
        %v1177 = vunpack.c.h.b16 %v851
        %v1178 = vunpack.c.l.b16 %v852
        %v1179 = vunpack.c.h.b16 %v852
        %v1180 = vunpack.c.l.b16 %v853
        %v1181 = vunpack.c.h.b16 %v853
        %v1182 = vunpack.c.l.b16 %v854
        %v1183 = vunpack.c.h.b16 %v854
        %v1184 = vunpack.c.l.b16 %v855
        %v1185 = vunpack.c.h.b16 %v855
        %v1186 = vunpack.c.l.b16 %v856
        %v1187 = vunpack.c.h.b16 %v856
        %v1188 = vunpack.c.l.b16 %v857
        %v1189 = vunpack.c.h.b16 %v857
        %v1190 = vunpack.c.l.b16 %v858
        %v1191 = vunpack.c.h.b16 %v858
        %v1192 = vunpack.c.l.b16 %v859
        %v1193 = vunpack.c.h.b16 %v859
        %v1194 = vunpack.c.l.b16 %v860
        %v1195 = vunpack.c.h.b16 %v860
        %v1196 = vunpack.c.l.b16 %v861
        %v1197 = vunpack.c.h.b16 %v861
        %v1198 = vunpack.c.l.b16 %v862
        %v1199 = vunpack.c.h.b16 %v862
        %v1200 = vunpack.c.l.b16 %v863
        %v1201 = vunpack.c.h.b16 %v863
        %v1202 = vunpack.c.l.b16 %v864
        %v1203 = vunpack.c.h.b16 %v864
        %v1204 = vunpack.c.l.b16 %v865
        %v1205 = vunpack.c.h.b16 %v865
        %v1206 = vunpack.c.l.b16 %v866
        %v1207 = vunpack.c.h.b16 %v866
        %v1208 = vunpack.c.l.b16 %v867
        %v1209 = vunpack.c.h.b16 %v867
        %v1210 = vunpack.c.l.b16 %v868
        %v1211 = vunpack.c.h.b16 %v868
        %v1212 = vunpack.c.l.b16 %v869
        %v1213 = vunpack.c.h.b16 %v869
        %v1214 = vunpack.c.l.b16 %v870
        %v1215 = vunpack.c.h.b16 %v870
        %v1216 = vunpack.c.l.b16 %v871
        %v1217 = vunpack.c.h.b16 %v871
        %v1218 = vunpack.c.l.b16 %v872
        %v1219 = vunpack.c.h.b16 %v872
        %v1220 = vunpack.c.l.b16 %v873
        %v1221 = vunpack.c.h.b16 %v873
        %v1222 = vunpack.c.l.b16 %v874
        %v1223 = vunpack.c.h.b16 %v874
        %v1224 = vunpack.c.l.b16 %v875
        %v1225 = vunpack.c.h.b16 %v875
        %v1226 = vunpack.c.l.b16 %v876
        %v1227 = vunpack.c.h.b16 %v876
        %v1228 = vunpack.c.l.b16 %v877
        %v1229 = vunpack.c.h.b16 %v877
        %v1230 = vunpack.c.l.b16 %v878
        %v1231 = vunpack.c.h.b16 %v878
        %v1232 = vunpack.c.l.b16 %v879
        %v1233 = vunpack.c.h.b16 %v879
        %v1234 = vunpack.c.l.b16 %v880
        %v1235 = vunpack.c.h.b16 %v880
        %v1236 = vunpack.c.l.b16 %v881
        %v1237 = vunpack.c.h.b16 %v881
        %v1238 = vunpack.c.l.b16 %v882
        %v1239 = vunpack.c.h.b16 %v882
        %v1240 = vunpack.c.l.b16 %v883
        %v1241 = vunpack.c.h.b16 %v883
        %v1242 = vunpack.c.l.b16 %v884
        %v1243 = vunpack.c.h.b16 %v884
        %v1244 = vunpack.c.l.b16 %v885
        %v1245 = vunpack.c.h.b16 %v885
        %v1246 = vunpack.c.l.b16 %v886
        %v1247 = vunpack.c.h.b16 %v886
        %v1248 = vunpack.c.l.b16 %v887
        %v1249 = vunpack.c.h.b16 %v887
        %v1250 = vunpack.c.l.b16 %v888
        %v1251 = vunpack.c.h.b16 %v888
        %v1252 = vunpack.c.l.b16 %v889
        %v1253 = vunpack.c.h.b16 %v889
        %v1254 = vunpack.c.l.b16 %v890
        %v1255 = vunpack.c.h.b16 %v890
        %v1256 = vunpack.c.l.b16 %v891
        %v1257 = vunpack.c.h.b16 %v891
        %v1258 = vunpack.c.l.b16 %v892
        %v1259 = vunpack.c.h.b16 %v892
        %v1260 = vunpack.c.l.b16 %v893
        %v1261 = vunpack.c.h.b16 %v893
        %v1262 = vunpack.c.l.b16 %v894
        %v1263 = vunpack.c.h.b16 %v894
        %v1264 = vunpack.c.l.b16 %v895
        %v1265 = vunpack.c.h.b16 %v895
        %v1266 = vunpack.c.l.b16 %v896
        %v1267 = vunpack.c.h.b16 %v896
        %v1268 = vunpack.c.l.b16 %v897
        %v1269 = vunpack.c.h.b16 %v897
        %v1270 = vunpack.c.l.b16 %v898
        %v1271 = vunpack.c.h.b16 %v898
        %v1272 = vunpack.c.l.b16 %v899
        %v1273 = vunpack.c.h.b16 %v899
        %v1274 = vunpack.c.l.b16 %v900
        %v1275 = vunpack.c.h.b16 %v900
        %v1276 = vunpack.c.l.b16 %v901
        %v1277 = vunpack.c.h.b16 %v901
        %v1278 = vunpack.c.l.b16 %v902
        %v1279 = vunpack.c.h.b16 %v902
        %v1280 = vunpack.c.l.b16 %v903
        %v1281 = vunpack.c.h.b16 %v903
        %v1282 = vunpack.c.l.b16 %v904
        %v1283 = vunpack.c.h.b16 %v904
        %v1284 = vunpack.c.l.b16 %v905
        %v1285 = vunpack.c.h.b16 %v905
        %v1286 = vunpack.c.l.b16 %v906
        %v1287 = vunpack.c.h.b16 %v906
        %v1288 = vunpack.c.l.b16 %v907
        %v1289 = vunpack.c.h.b16 %v907
        %v1290 = vunpack.c.l.b16 %v908
        %v1291 = vunpack.c.h.b16 %v908
        %v1292 = vunpack.c.l.b16 %v909
        %v1293 = vunpack.c.h.b16 %v909
        %v1294 = vunpack.c.l.b16 %v910
        %v1295 = vunpack.c.h.b16 %v910
        %v1296 = vunpack.c.l.b16 %v911
        %v1297 = vunpack.c.h.b16 %v911
        %v1298 = vunpack.c.l.b16 %v912
        %v1299 = vunpack.c.h.b16 %v912
        %v1300 = vunpack.c.l.b16 %v913
        %v1301 = vunpack.c.h.b16 %v913
        %v1302 = vunpack.c.l.b16 %v914
        %v1303 = vunpack.c.h.b16 %v914
        %v1304 = vunpack.c.l.b16 %v915
        %v1305 = vunpack.c.h.b16 %v915
        %v1306 = vunpack.c.l.b16 %v916
        %v1307 = vunpack.c.h.b16 %v916
        %v1308 = vunpack.c.l.b16 %v917
        %v1309 = vunpack.c.h.b16 %v917
        %v1310 = vunpack.c.l.b16 %v918
        %v1311 = vunpack.c.h.b16 %v918
        %v1312 = vunpack.c.l.b16 %v919
        %v1313 = vunpack.c.h.b16 %v919
        %v1314 = vunpack.c.l.b16 %v920
        %v1315 = vunpack.c.h.b16 %v920
        %v1316 = vunpack.c.l.b16 %v921
        %v1317 = vunpack.c.h.b16 %v921
        %v1318 = vunpack.c.l.b16 %v922
        %v1319 = vunpack.c.h.b16 %v922
        %v1320 = vunpack.c.l.b16 %v923
        %v1321 = vunpack.c.h.b16 %v923
        %v1322 = vunpack.c.l.b16 %v924
        %v1323 = vunpack.c.h.b16 %v924
        %v1324 = vunpack.c.l.b16 %v925
        %v1325 = vunpack.c.h.b16 %v925
        %v1326 = vunpack.c.l.b16 %v926
        %v1327 = vunpack.c.h.b16 %v926
        %v1328 = vunpack.c.l.b16 %v927
        %v1329 = vunpack.c.h.b16 %v927
        %v1330 = vunpack.c.l.b16 %v928
        %v1331 = vunpack.c.h.b16 %v928
        %v1332 = vunpack.c.l.b16 %v929
        %v1333 = vunpack.c.h.b16 %v929
        %v1334 = vunpack.c.l.b16 %v930
        %v1335 = vunpack.c.h.b16 %v930
        %v1336 = vunpack.c.l.b16 %v931
        %v1337 = vunpack.c.h.b16 %v931
        %v1338 = vunpack.c.l.b16 %v932
        %v1339 = vunpack.c.h.b16 %v932
        %v1340 = vunpack.c.l.b16 %v933
        %v1341 = vunpack.c.h.b16 %v933
        %v1342 = vunpack.c.l.b16 %v934
        %v1343 = vunpack.c.h.b16 %v934
        %v1344 = vpack.c.b16 %v1096, %v1088
        %v1345 = vpack.c.b16 %v1097, %v1089
        %v1346 = vpack.c.b16 %v1098, %v1090
        %v1347 = vpack.c.b16 %v1099, %v1091
        %v1348 = vpack.c.b16 %v1100, %v1092
        %v1349 = vpack.c.b16 %v1101, %v1093
        %v1350 = vpack.c.b16 %v1102, %v1094
        %v1351 = vpack.c.b16 %v1103, %v1095
        %v1352 = vpack.c.b16 %v1112, %v1104
        %v1353 = vpack.c.b16 %v1113, %v1105
        %v1354 = vpack.c.b16 %v1114, %v1106
        %v1355 = vpack.c.b16 %v1115, %v1107
        %v1356 = vpack.c.b16 %v1116, %v1108
        %v1357 = vpack.c.b16 %v1117, %v1109
        %v1358 = vpack.c.b16 %v1118, %v1110
        %v1359 = vpack.c.b16 %v1119, %v1111
        %v1360 = vpack.c.b16 %v1128, %v1120
        %v1361 = vpack.c.b16 %v1129, %v1121
        %v1362 = vpack.c.b16 %v1130, %v1122
        %v1363 = vpack.c.b16 %v1131, %v1123
        %v1364 = vpack.c.b16 %v1132, %v1124
        %v1365 = vpack.c.b16 %v1133, %v1125
        %v1366 = vpack.c.b16 %v1134, %v1126
        %v1367 = vpack.c.b16 %v1135, %v1127
        %v1368 = vpack.c.b16 %v1144, %v1136
        %v1369 = vpack.c.b16 %v1145, %v1137
        %v1370 = vpack.c.b16 %v1146, %v1138
        %v1371 = vpack.c.b16 %v1147, %v1139
        %v1372 = vpack.c.b16 %v1148, %v1140
        %v1373 = vpack.c.b16 %v1149, %v1141
        %v1374 = vpack.c.b16 %v1150, %v1142
        %v1375 = vpack.c.b16 %v1151, %v1143
        %v1376 = vpack.c.b16 %v1160, %v1152
        %v1377 = vpack.c.b16 %v1161, %v1153
        %v1378 = vpack.c.b16 %v1162, %v1154
        %v1379 = vpack.c.b16 %v1163, %v1155
        %v1380 = vpack.c.b16 %v1164, %v1156
        %v1381 = vpack.c.b16 %v1165, %v1157
        %v1382 = vpack.c.b16 %v1166, %v1158
        %v1383 = vpack.c.b16 %v1167, %v1159
        %v1384 = vpack.c.b16 %v1176, %v1168
        %v1385 = vpack.c.b16 %v1177, %v1169
        %v1386 = vpack.c.b16 %v1178, %v1170
        %v1387 = vpack.c.b16 %v1179, %v1171
        %v1388 = vpack.c.b16 %v1180, %v1172
        %v1389 = vpack.c.b16 %v1181, %v1173
        %v1390 = vpack.c.b16 %v1182, %v1174
        %v1391 = vpack.c.b16 %v1183, %v1175
        %v1392 = vpack.c.b16 %v1192, %v1184
        %v1393 = vpack.c.b16 %v1193, %v1185
        %v1394 = vpack.c.b16 %v1194, %v1186
        %v1395 = vpack.c.b16 %v1195, %v1187
        %v1396 = vpack.c.b16 %v1196, %v1188
        %v1397 = vpack.c.b16 %v1197, %v1189
        %v1398 = vpack.c.b16 %v1198, %v1190
        %v1399 = vpack.c.b16 %v1199, %v1191
        %v1400 = vpack.c.b16 %v1208, %v1200
        %v1401 = vpack.c.b16 %v1209, %v1201
        %v1402 = vpack.c.b16 %v1210, %v1202
        %v1403 = vpack.c.b16 %v1211, %v1203
        %v1404 = vpack.c.b16 %v1212, %v1204
        %v1405 = vpack.c.b16 %v1213, %v1205
        %v1406 = vpack.c.b16 %v1214, %v1206
        %v1407 = vpack.c.b16 %v1215, %v1207
        %v1408 = vpack.c.b16 %v1224, %v1216
        %v1409 = vpack.c.b16 %v1225, %v1217
        %v1410 = vpack.c.b16 %v1226, %v1218
        %v1411 = vpack.c.b16 %v1227, %v1219
        %v1412 = vpack.c.b16 %v1228, %v1220
        %v1413 = vpack.c.b16 %v1229, %v1221
        %v1414 = vpack.c.b16 %v1230, %v1222
        %v1415 = vpack.c.b16 %v1231, %v1223
        %v1416 = vpack.c.b16 %v1240, %v1232
        %v1417 = vpack.c.b16 %v1241, %v1233
        %v1418 = vpack.c.b16 %v1242, %v1234
        %v1419 = vpack.c.b16 %v1243, %v1235
        %v1420 = vpack.c.b16 %v1244, %v1236
        %v1421 = vpack.c.b16 %v1245, %v1237
        %v1422 = vpack.c.b16 %v1246, %v1238
        %v1423 = vpack.c.b16 %v1247, %v1239
        %v1424 = vpack.c.b16 %v1256, %v1248
        %v1425 = vpack.c.b16 %v1257, %v1249
        %v1426 = vpack.c.b16 %v1258, %v1250
        %v1427 = vpack.c.b16 %v1259, %v1251
        %v1428 = vpack.c.b16 %v1260, %v1252
        %v1429 = vpack.c.b16 %v1261, %v1253
        %v1430 = vpack.c.b16 %v1262, %v1254
        %v1431 = vpack.c.b16 %v1263, %v1255
        %v1432 = vpack.c.b16 %v1272, %v1264
        %v1433 = vpack.c.b16 %v1273, %v1265
        %v1434 = vpack.c.b16 %v1274, %v1266
        %v1435 = vpack.c.b16 %v1275, %v1267
        %v1436 = vpack.c.b16 %v1276, %v1268
        %v1437 = vpack.c.b16 %v1277, %v1269
        %v1438 = vpack.c.b16 %v1278, %v1270
        %v1439 = vpack.c.b16 %v1279, %v1271
        %v1440 = vpack.c.b16 %v1288, %v1280
        %v1441 = vpack.c.b16 %v1289, %v1281
        %v1442 = vpack.c.b16 %v1290, %v1282
        %v1443 = vpack.c.b16 %v1291, %v1283
        %v1444 = vpack.c.b16 %v1292, %v1284
        %v1445 = vpack.c.b16 %v1293, %v1285
        %v1446 = vpack.c.b16 %v1294, %v1286
        %v1447 = vpack.c.b16 %v1295, %v1287
        %v1448 = vpack.c.b16 %v1304, %v1296
        %v1449 = vpack.c.b16 %v1305, %v1297
        %v1450 = vpack.c.b16 %v1306, %v1298
        %v1451 = vpack.c.b16 %v1307, %v1299
        %v1452 = vpack.c.b16 %v1308, %v1300
        %v1453 = vpack.c.b16 %v1309, %v1301
        %v1454 = vpack.c.b16 %v1310, %v1302
        %v1455 = vpack.c.b16 %v1311, %v1303
        %v1456 = vpack.c.b16 %v1320, %v1312
        %v1457 = vpack.c.b16 %v1321, %v1313
        %v1458 = vpack.c.b16 %v1322, %v1314
        %v1459 = vpack.c.b16 %v1323, %v1315
        %v1460 = vpack.c.b16 %v1324, %v1316
        %v1461 = vpack.c.b16 %v1325, %v1317
        %v1462 = vpack.c.b16 %v1326, %v1318
        %v1463 = vpack.c.b16 %v1327, %v1319
        %v1464 = vpack.c.b16 %v1336, %v1328
        %v1465 = vpack.c.b16 %v1337, %v1329
        %v1466 = vpack.c.b16 %v1338, %v1330
        %v1467 = vpack.c.b16 %v1339, %v1331
        %v1468 = vpack.c.b16 %v1340, %v1332
        %v1469 = vpack.c.b16 %v1341, %v1333
        %v1470 = vpack.c.b16 %v1342, %v1334
        %v1471 = vpack.c.b16 %v1343, %v1335
        %1600 = vmatpush.bf16.msra.mxu0 %v1400
        %1601 = vmatpush.bf16.msra.mxu0 %v1392
        %1602 = vmatpush.bf16.msra.mxu0 %v1384
        %1603 = vmatpush.bf16.msra.mxu0 %v1376
        %1604 = vmatpush.bf16.msra.mxu0 %v1368
        %1605 = vmatpush.bf16.msra.mxu0 %v1360
        %1606 = vmatpush.bf16.msra.mxu0 %v1352
        %1607 = vmatpush.bf16.msra.mxu0 %v1344
        %1608 = vmatmul.bf16.gmra.mxu0 %v956
        %v1609 = vpop.f32.mrf.mxu0
        %v1610 = vadd.f32 %v937, %v1609
        %v1611 = vpop.f32.mrf.mxu0
        %1612 = vdwg.mxu0
        %1613 = vmatpush.bf16.msra.mxu0 %v1464
        %1614 = vmatpush.bf16.msra.mxu0 %v1456
        %1615 = vmatpush.bf16.msra.mxu0 %v1448
        %1616 = vmatpush.bf16.msra.mxu0 %v1440
        %1617 = vmatpush.bf16.msra.mxu0 %v1432
        %1618 = vmatpush.bf16.msra.mxu0 %v1424
        %1619 = vmatpush.bf16.msra.mxu0 %v1416
        %1620 = vmatpush.bf16.msra.mxu0 %v1408
        %1621 = vmatmul.bf16.gmra.mxu0 %v957
        %v1622 = vpop.f32.mrf.mxu0
        %v1623 = vadd.f32 %v1610, %v1622
        %v1624 = vpop.f32.mrf.mxu0
        %1625 = vdwg.mxu0
        %1626 = vmatpush.bf16.msra.mxu0 %v1401
        %1627 = vmatpush.bf16.msra.mxu0 %v1393
        %1628 = vmatpush.bf16.msra.mxu0 %v1385
        %1629 = vmatpush.bf16.msra.mxu0 %v1377
        %1630 = vmatpush.bf16.msra.mxu0 %v1369
        %1631 = vmatpush.bf16.msra.mxu0 %v1361
        %1632 = vmatpush.bf16.msra.mxu0 %v1353
        %1633 = vmatpush.bf16.msra.mxu0 %v1345
        %1634 = vmatmul.bf16.gmra.mxu0 %v956
        %v1635 = vpop.f32.mrf.mxu0
        %v1636 = vadd.f32 %v938, %v1635
        %v1637 = vpop.f32.mrf.mxu0
        %1638 = vdwg.mxu0
        %1639 = vmatpush.bf16.msra.mxu0 %v1465
        %1640 = vmatpush.bf16.msra.mxu0 %v1457
        %1641 = vmatpush.bf16.msra.mxu0 %v1449
        %1642 = vmatpush.bf16.msra.mxu0 %v1441
        %1643 = vmatpush.bf16.msra.mxu0 %v1433
        %1644 = vmatpush.bf16.msra.mxu0 %v1425
        %1645 = vmatpush.bf16.msra.mxu0 %v1417
        %1646 = vmatpush.bf16.msra.mxu0 %v1409
        %1647 = vmatmul.bf16.gmra.mxu0 %v957
        %v1648 = vpop.f32.mrf.mxu0
        %v1649 = vadd.f32 %v1636, %v1648
        %v1650 = vpop.f32.mrf.mxu0
        %1651 = vdwg.mxu0
        %1652 = vmatpush.bf16.msra.mxu0 %v1402
        %1653 = vmatpush.bf16.msra.mxu0 %v1394
        %1654 = vmatpush.bf16.msra.mxu0 %v1386
        %1655 = vmatpush.bf16.msra.mxu0 %v1378
        %1656 = vmatpush.bf16.msra.mxu0 %v1370
        %1657 = vmatpush.bf16.msra.mxu0 %v1362
        %1658 = vmatpush.bf16.msra.mxu0 %v1354
        %1659 = vmatpush.bf16.msra.mxu0 %v1346
        %1660 = vmatmul.bf16.gmra.mxu0 %v956
        %v1661 = vpop.f32.mrf.mxu0
        %v1662 = vadd.f32 %v939, %v1661
        %v1663 = vpop.f32.mrf.mxu0
        %1664 = vdwg.mxu0
        %1665 = vmatpush.bf16.msra.mxu0 %v1466
        %1666 = vmatpush.bf16.msra.mxu0 %v1458
        %1667 = vmatpush.bf16.msra.mxu0 %v1450
        %1668 = vmatpush.bf16.msra.mxu0 %v1442
        %1669 = vmatpush.bf16.msra.mxu0 %v1434
        %1670 = vmatpush.bf16.msra.mxu0 %v1426
        %1671 = vmatpush.bf16.msra.mxu0 %v1418
        %1672 = vmatpush.bf16.msra.mxu0 %v1410
        %1673 = vmatmul.bf16.gmra.mxu0 %v957
        %v1674 = vpop.f32.mrf.mxu0
        %v1675 = vadd.f32 %v1662, %v1674
        %v1676 = vpop.f32.mrf.mxu0
        %1677 = vdwg.mxu0
        %1678 = vmatpush.bf16.msra.mxu0 %v1403
        %1679 = vmatpush.bf16.msra.mxu0 %v1395
        %1680 = vmatpush.bf16.msra.mxu0 %v1387
        %1681 = vmatpush.bf16.msra.mxu0 %v1379
        %1682 = vmatpush.bf16.msra.mxu0 %v1371
        %1683 = vmatpush.bf16.msra.mxu0 %v1363
        %1684 = vmatpush.bf16.msra.mxu0 %v1355
        %1685 = vmatpush.bf16.msra.mxu0 %v1347
        %1686 = vmatmul.bf16.gmra.mxu0 %v956
        %v1687 = vpop.f32.mrf.mxu0
        %v1688 = vadd.f32 %v940, %v1687
        %v1689 = vpop.f32.mrf.mxu0
        %1690 = vdwg.mxu0
        %1691 = vmatpush.bf16.msra.mxu0 %v1467
        %1692 = vmatpush.bf16.msra.mxu0 %v1459
        %1693 = vmatpush.bf16.msra.mxu0 %v1451
        %1694 = vmatpush.bf16.msra.mxu0 %v1443
        %1695 = vmatpush.bf16.msra.mxu0 %v1435
        %1696 = vmatpush.bf16.msra.mxu0 %v1427
        %1697 = vmatpush.bf16.msra.mxu0 %v1419
        %1698 = vmatpush.bf16.msra.mxu0 %v1411
        %1699 = vmatmul.bf16.gmra.mxu0 %v957
        %v1700 = vpop.f32.mrf.mxu0
        %v1701 = vadd.f32 %v1688, %v1700
        %v1702 = vpop.f32.mrf.mxu0
        %1703 = vdwg.mxu0
        %1704 = vmatpush.bf16.msra.mxu0 %v1404
        %1705 = vmatpush.bf16.msra.mxu0 %v1396
        %1706 = vmatpush.bf16.msra.mxu0 %v1388
        %1707 = vmatpush.bf16.msra.mxu0 %v1380
        %1708 = vmatpush.bf16.msra.mxu0 %v1372
        %1709 = vmatpush.bf16.msra.mxu0 %v1364
        %1710 = vmatpush.bf16.msra.mxu0 %v1356
        %1711 = vmatpush.bf16.msra.mxu0 %v1348
        %1712 = vmatmul.bf16.gmra.mxu0 %v956
        %v1713 = vpop.f32.mrf.mxu0
        %v1714 = vadd.f32 %v941, %v1713
        %v1715 = vpop.f32.mrf.mxu0
        %1716 = vdwg.mxu0
        %1717 = vmatpush.bf16.msra.mxu0 %v1468
        %1718 = vmatpush.bf16.msra.mxu0 %v1460
        %1719 = vmatpush.bf16.msra.mxu0 %v1452
        %1720 = vmatpush.bf16.msra.mxu0 %v1444
        %1721 = vmatpush.bf16.msra.mxu0 %v1436
        %1722 = vmatpush.bf16.msra.mxu0 %v1428
        %1723 = vmatpush.bf16.msra.mxu0 %v1420
        %1724 = vmatpush.bf16.msra.mxu0 %v1412
        %1725 = vmatmul.bf16.gmra.mxu0 %v957
        %v1726 = vpop.f32.mrf.mxu0
        %v1727 = vadd.f32 %v1714, %v1726
        %v1728 = vpop.f32.mrf.mxu0
        %1729 = vdwg.mxu0
        %1730 = vmatpush.bf16.msra.mxu0 %v1405
        %1731 = vmatpush.bf16.msra.mxu0 %v1397
        %1732 = vmatpush.bf16.msra.mxu0 %v1389
        %1733 = vmatpush.bf16.msra.mxu0 %v1381
        %1734 = vmatpush.bf16.msra.mxu0 %v1373
        %1735 = vmatpush.bf16.msra.mxu0 %v1365
        %1736 = vmatpush.bf16.msra.mxu0 %v1357
        %1737 = vmatpush.bf16.msra.mxu0 %v1349
        %1738 = vmatmul.bf16.gmra.mxu0 %v956
        %v1739 = vpop.f32.mrf.mxu0
        %v1740 = vadd.f32 %v942, %v1739
        %v1741 = vpop.f32.mrf.mxu0
        %1742 = vdwg.mxu0
        %1743 = vmatpush.bf16.msra.mxu0 %v1469
        %1744 = vmatpush.bf16.msra.mxu0 %v1461
        %1745 = vmatpush.bf16.msra.mxu0 %v1453
        %1746 = vmatpush.bf16.msra.mxu0 %v1445
        %1747 = vmatpush.bf16.msra.mxu0 %v1437
        %1748 = vmatpush.bf16.msra.mxu0 %v1429
        %1749 = vmatpush.bf16.msra.mxu0 %v1421
        %1750 = vmatpush.bf16.msra.mxu0 %v1413
        %1751 = vmatmul.bf16.gmra.mxu0 %v957
        %v1752 = vpop.f32.mrf.mxu0
        %v1753 = vadd.f32 %v1740, %v1752
        %v1754 = vpop.f32.mrf.mxu0
        %1755 = vdwg.mxu0
        %1756 = vmatpush.bf16.msra.mxu0 %v1406
        %1757 = vmatpush.bf16.msra.mxu0 %v1398
        %1758 = vmatpush.bf16.msra.mxu0 %v1390
        %1759 = vmatpush.bf16.msra.mxu0 %v1382
        %1760 = vmatpush.bf16.msra.mxu0 %v1374
        %1761 = vmatpush.bf16.msra.mxu0 %v1366
        %1762 = vmatpush.bf16.msra.mxu0 %v1358
        %1763 = vmatpush.bf16.msra.mxu0 %v1350
        %1764 = vmatmul.bf16.gmra.mxu0 %v956
        %v1765 = vpop.f32.mrf.mxu0
        %v1766 = vadd.f32 %v943, %v1765
        %v1767 = vpop.f32.mrf.mxu0
        %1768 = vdwg.mxu0
        %1769 = vmatpush.bf16.msra.mxu0 %v1470
        %1770 = vmatpush.bf16.msra.mxu0 %v1462
        %1771 = vmatpush.bf16.msra.mxu0 %v1454
        %1772 = vmatpush.bf16.msra.mxu0 %v1446
        %1773 = vmatpush.bf16.msra.mxu0 %v1438
        %1774 = vmatpush.bf16.msra.mxu0 %v1430
        %1775 = vmatpush.bf16.msra.mxu0 %v1422
        %1776 = vmatpush.bf16.msra.mxu0 %v1414
        %1777 = vmatmul.bf16.gmra.mxu0 %v957
        %v1778 = vpop.f32.mrf.mxu0
        %v1779 = vadd.f32 %v1766, %v1778
        %v1780 = vpop.f32.mrf.mxu0
        %1781 = vdwg.mxu0
        %1782 = vmatpush.bf16.msra.mxu0 %v1407
        %1783 = vmatpush.bf16.msra.mxu0 %v1399
        %1784 = vmatpush.bf16.msra.mxu0 %v1391
        %1785 = vmatpush.bf16.msra.mxu0 %v1383
        %1786 = vmatpush.bf16.msra.mxu0 %v1375
        %1787 = vmatpush.bf16.msra.mxu0 %v1367
        %1788 = vmatpush.bf16.msra.mxu0 %v1359
        %1789 = vmatpush.bf16.msra.mxu0 %v1351
        %1790 = vmatmul.bf16.gmra.mxu0 %v956
        %v1791 = vpop.f32.mrf.mxu0
        %v1792 = vadd.f32 %v944, %v1791
        %v1793 = vpop.f32.mrf.mxu0
        %1794 = vdwg.mxu0
        %1795 = vmatpush.bf16.msra.mxu0 %v1471
        %1796 = vmatpush.bf16.msra.mxu0 %v1463
        %1797 = vmatpush.bf16.msra.mxu0 %v1455
        %1798 = vmatpush.bf16.msra.mxu0 %v1447
        %1799 = vmatpush.bf16.msra.mxu0 %v1439
        %1800 = vmatpush.bf16.msra.mxu0 %v1431
        %1801 = vmatpush.bf16.msra.mxu0 %v1423
        %1802 = vmatpush.bf16.msra.mxu0 %v1415
        %1803 = vmatmul.bf16.gmra.mxu0 %v957
        %v1804 = vpop.f32.mrf.mxu0
        %v1805 = vadd.f32 %v1792, %v1804
        %v1806 = vpop.f32.mrf.mxu0
        %1807 = vdwg.mxu0
        %1808 = vst [vmem:[%s402] sm:$0xff] %v1623
        %1809 = vst [vmem:[%s402 + $0x8] sm:$0xff] %v1649
        %1810 = vst [vmem:[%s402 + $0x10] sm:$0xff] %v1675
        %1811 = vst [vmem:[%s402 + $0x18] sm:$0xff] %v1701
        %1812 = vst [vmem:[%s402 + $0x20] sm:$0xff] %v1727
        %1813 = vst [vmem:[%s402 + $0x28] sm:$0xff] %v1753
        %1814 = vst [vmem:[%s402 + $0x30] sm:$0xff] %v1779
        %1815 = vst [vmem:[%s402 + $0x38] sm:$0xff] %v1805
        %s1816 = sand.u32 %s211, 1
        %s1817 = scalar_lea.sflag [#allocation5], %s1816
        %s1818 = sand.u32 %s211, 1
        %s1819 = smul.addr %s1818, 64
        %s1820 = scalar_lea.vmem [#allocation14], %s1819
        // Predicated region
        $region77: #{tpu_custom_call.1} parent=47 // pred_check
          %p1821 = pneg %p221
        $region78: #{tpu_custom_call.1} parent=47 // pred_check_branch
          %1823 = sbr.rel (%p1821) target = $region80
        $region79: #{tpu_custom_call.1} parent=47 // pred_region
          %s1824 = smul.u32 8, %s32
          %1826 = vsyncadd %s1817, 0
          %s1827 = smul.addr %s31, 8
          %s1828 = sadd.s32 %s1824, %s1827
          %s1829 = smul.addr %s1828, 8
          %s1830 = scalar_lea.hbm %s7, %s1829
          %s1832 = sshll.u32 %s1820, 4
          %s1833 = int_to_ptr.vmem [resolvable:$true] %s1832
          %s1834 = sshll.u32 %s1830, 4
          %s1835 = int_to_ptr.hbm [resolvable:$true] %s1834
          %1837 = dma.vmem_to_hbm [thread:$0]  %s1833, 1024, %s1835, %s1817
        $region80: #{tpu_custom_call.1} parent=47 // pred_fallthru
          _
      $region48: #{tpu_custom_call.1} parent=5 // pred_fallthru
        _
      %p1838 = scmp.le.s32.totalorder 2, %s22
      // Predicated region
      $region81: #{tpu_custom_call.1} parent=5 // pred_check
        %p1839 = pneg %p1838
      $region82: #{tpu_custom_call.1} parent=5 // pred_check_branch
        %1841 = sbr.rel (%p1839) target = $region84
      $region83: #{tpu_custom_call.1} parent=5 // pred_region
        %s1842 = ssub.s32 %s22, 2
        // Predicated region
        $region85: #{tpu_custom_call.1} parent=83 // pred_check
          %p1843 = pneg %p227
        $region86: #{tpu_custom_call.1} parent=83 // pred_check_branch
          %1845 = sbr.rel (%p1843) target = $region88
        $region87: #{tpu_custom_call.1} parent=83 // pred_region
          %s1846 = sand.u32 %s212, 1
          %s1847 = scalar_lea.sflag [#allocation5], %s1846
          %s1848 = sand.u32 %s212, 1
          %s1849 = smul.addr %s1848, 64
          %s1850 = scalar_lea.vmem [#allocation14], %s1849
          %1852 = dma.done %s1847, 1024
        $region88: #{tpu_custom_call.1} parent=83 // pred_fallthru
          _
      $region84: #{tpu_custom_call.1} parent=5 // pred_fallthru
        _
    $region6: #{tpu_custom_call.1} parent=1 // loop_footer
      %s26 = sadd.s32 1, %s22
    $region7: #{tpu_custom_call.1} parent=1 // loop_footer_branch
      %21 = sbr.rel target = $region3
    $region8: #{tpu_custom_call.1} parent=1 // loop_exit
      _
    %1853 = vsyncpa [#allocation4], 1
    %s1854 = scalar_lea.sflag [#allocation4], 1
    %1855 = vsyncpa %s1854, 1
    %1856 = vsyncpa [#allocation7], 1
    %1857 = vsyncpa [#allocation10], 1
    %1858 = vsyncpa [#allocation13], 1
    %1859 = vsyncpa [#allocation5], 1
    %s1860 = scalar_lea.sflag [#allocation5], 1
    %1861 = vsyncpa %s1860, 1

</llo_original>
